<compile_context>
chip_gen: v7x
topology: tpu7x:2x2x1
jax: 0.10.0
libtpu: 0.0.40
codegen_flags: <defaults>
</compile_context>

<pallas_src>
import functools

import jax
import jax.numpy as jnp
from jax import lax
from jax.experimental import pallas as pl
from jax.experimental.pallas import tpu as pltpu

NUM_HEADS = 8
_LANES = 128


def _temporal_attn_kernel(x_ref, wqkv_ref, wproj_ref, bproj_ref, o_ref,
                          qkv_ref, merged_ref, *, b_blk, seq_len, num_heads):
    # x_ref:      (rows, Cp)     VMEM bf16   rows = b_blk * T batch rows
    # wqkv_ref:   (Cp, 3Cp)      VMEM bf16   grid-invariant, single-buffered
    # wproj_ref:  (Cp, Cp)       VMEM bf16   grid-invariant, single-buffered
    # bproj_ref:  (1, Cp)        VMEM f32
    # o_ref:      (rows, Cp)     VMEM
    # qkv_ref:    (rows, 3Cp)    VMEM bf16 scratch (staged QKV projection)
    # merged_ref: (rows, Cp)     VMEM bf16 scratch (merged head outputs)
    T = seq_len
    H = num_heads
    Cp = x_ref.shape[-1]
    Dhp = Cp // H

    # 1) Fused QKV projection over all rows: bf16 operands on the MXU, f32
    #    accumulation, staged straight into a bf16 VMEM scratch so the
    #    (rows, 3Cp) value is never kept live across the attention loop.
    qkv_ref[...] = jnp.dot(
        x_ref[...], wqkv_ref[...],
        preferred_element_type=jnp.float32).astype(qkv_ref.dtype)

    # 2) Attention, one batch row per fori_loop step (compact codegen); only
    #    the small H-head loop is unrolled.  All head outputs of a row are
    #    merged into a single lane-dense (T, Cp) store.
    def row_body(b, carry):
        r0 = b * T
        if T % 8 == 0:                       # static: row start sublane-aligned
            r0 = pl.multiple_of(r0, 8)
        heads = []
        for h in range(H):
            qh = qkv_ref[pl.ds(r0, T), h * Dhp:(h + 1) * Dhp]            # (T, Dhp)
            kh = qkv_ref[pl.ds(r0, T), Cp + h * Dhp:Cp + (h + 1) * Dhp]
            vh = qkv_ref[pl.ds(r0, T), 2 * Cp + h * Dhp:2 * Cp + (h + 1) * Dhp]
            # Q @ K^T contracting the last dims (trans_b on the MXU); the
            # per-head temperature is pre-folded into the Q weight columns.
            s = lax.dot_general(qh, kh, (((1,), (1,)), ((), ())),
                                preferred_element_type=jnp.float32)      # (T, T)
            m = jnp.max(s, axis=-1, keepdims=True)
            e = jnp.exp(s - m)
            denom = jnp.sum(e, axis=-1, keepdims=True)
            # Deferred softmax normalization: never divide the (T, T) tile,
            # rescale the (T, Dhp) head output once via the EUP reciprocal.
            oh = jnp.dot(e.astype(jnp.bfloat16), vh,
                         preferred_element_type=jnp.float32)             # (T, Dhp)
            heads.append(oh * pl.reciprocal(denom, approx=True))
        merged_ref[pl.ds(r0, T), :] = (
            jnp.concatenate(heads, axis=-1).astype(merged_ref.dtype))
        return carry

    lax.fori_loop(0, b_blk, row_body, 0)

    # 3) Output projection + bias over all rows at once (bf16 MXU, f32 acc).
    y = jnp.dot(merged_ref[...], wproj_ref[...],
                preferred_element_type=jnp.float32)
    o_ref[...] = (y + bproj_ref[...]).astype(o_ref.dtype)


def _default_target_rows(Cp):
    """Row-block target per TPU generation, capped by a VMEM budget."""
    try:
        kind = jax.devices()[0].device_kind.lower()
    except Exception:
        kind = ""
    if "v6" in kind:                                # 128 MiB VMEM, 256-wide MXU
        rows = 1024
    elif "v5 lite" in kind or "v5e" in kind:        # 16 MiB default scoped VMEM
        rows = 256
    else:                                           # v7x (64 MiB, 2 TCs) / default
        rows = 256
    # ~bytes per row: 2x bf16 x block + 2x f32 out block (double-buffered)
    # + bf16 qkv scratch (3*Cp) + bf16 merged scratch.
    per_row_bytes = 20 * Cp
    return max(8, min(rows, (24 << 20) // per_row_bytes))


def _pick_batch_block(B, T, target_rows, min_steps=2):
    """Pick b_blk | B so the (b_blk*T, Cp) row block is BlockSpec-legal
    (sublane multiple of 8, or the full extent), rows stay near target_rows,
    and there are >= min_steps grid steps whenever B allows (so the v7x
    TensorCores / DMA pipeline have neighbours to overlap)."""
    valid = [d for d in range(1, B + 1)
             if B % d == 0 and ((d * T) % 8 == 0 or d == B)]

    def choose(cands):
        fit = [d for d in cands if d * T <= max(T, target_rows)]
        return max(fit) if fit else min(cands)

    multi = [d for d in valid if B // d >= min_steps]
    return choose(multi) if multi else choose(valid)


def _prepare_params(w_qkv, w_proj, b_proj, temperature, H, Dh, Dhp, Cp):
    """One-time wrapper-side layout plumbing (free relative to in-kernel ops):
    per-head widths zero-padded Dh -> Dhp so every in-kernel slab is 128-lane
    dense, temperature folded into the Q weight columns, weights cast to bf16."""
    C = H * Dh
    t_cols = jnp.repeat(temperature.reshape(-1).astype(jnp.float32), Dh)
    wq = w_qkv[:, 0 * C:1 * C] * t_cols[None, :]
    wk = w_qkv[:, 1 * C:2 * C]
    wv = w_qkv[:, 2 * C:3 * C]

    def pad_qkv_block(w):        # (C, C) -> (Cp, Cp): per-head col pad, zero rows
        w = w.reshape(C, H, Dh)
        w = jnp.pad(w, ((0, Cp - C), (0, 0), (0, Dhp - Dh)))
        return w.reshape(Cp, Cp)

    w_qkv_p = jnp.concatenate(
        [pad_qkv_block(wq), pad_qkv_block(wk), pad_qkv_block(wv)], axis=1)

    wp = w_proj.reshape(H, Dh, C)        # per-head row pad + zero-padded out cols
    wp = jnp.pad(wp, ((0, 0), (0, Dhp - Dh), (0, Cp - C)))
    w_proj_p = wp.reshape(Cp, Cp)

    b_proj_p = jnp.pad(b_proj.reshape(-1), (0, Cp - C)).reshape(1, Cp)
    return (w_qkv_p.astype(jnp.bfloat16), w_proj_p.astype(jnp.bfloat16),
            b_proj_p.astype(jnp.float32))


def temporal_attention(x, w_qkv, w_proj, b_proj, temperature,
                       num_heads=NUM_HEADS):
    """x: (B, T, C); w_qkv: (C, 3C); w_proj: (C, C); b_proj: (C,);
    temperature: (H,) or (H, 1, 1)."""
    B, T, C = x.shape
    H = num_heads
    assert C % H == 0
    Dh = C // H

    # Pad the channel dim to a multiple of 128 lanes (per-head Dh -> Dhp) so
    # the x blocks, qkv/merged scratch and the output slab are all lane-dense.
    Cp = max(_LANES, ((C + _LANES - 1) // _LANES) * _LANES)
    assert Cp % H == 0, "num_heads must divide the 128-padded channel dim"
    Dhp = Cp // H

    w_qkv_p, w_proj_p, b_proj_p = _prepare_params(
        w_qkv, w_proj, b_proj, temperature, H, Dh, Dhp, Cp)
    x_p = jnp.pad(x.reshape(B * T, C),
                  ((0, 0), (0, Cp - C))).astype(jnp.bfloat16)

    b_blk = _pick_batch_block(B, T, _default_target_rows(Cp))
    rows = b_blk * T
    assert rows % 8 == 0 or rows == B * T          # (8,128) BlockSpec rule

    out_isz = jnp.dtype(x.dtype).itemsize
    vmem_est = (2 * rows * Cp * 2                  # x blocks (bf16, 2 buffers)
                + 2 * rows * Cp * out_isz          # out blocks (2 buffers)
                + 4 * Cp * Cp * 2 + Cp * 4         # w_qkv + w_proj (bf16) + bias
                + rows * 4 * Cp * 2)               # qkv + merged scratch (bf16)
    vmem_limit = int(min(max(2 * vmem_est, 32 << 20), 64 << 20))

    kernel = functools.partial(_temporal_attn_kernel,
                               b_blk=b_blk, seq_len=T, num_heads=H)

    out2 = pl.pallas_call(
        kernel,
        out_shape=jax.ShapeDtypeStruct((B * T, Cp), x.dtype),
        grid=(B // b_blk,),
        in_specs=[
            pl.BlockSpec((rows, Cp), lambda i: (i, 0)),            # x rows
            pl.BlockSpec(memory_space=pltpu.MemorySpace.VMEM),     # w_qkv (invariant)
            pl.BlockSpec(memory_space=pltpu.MemorySpace.VMEM),     # w_proj (invariant)
            pl.BlockSpec(memory_space=pltpu.MemorySpace.VMEM),     # b_proj
        ],
        out_specs=pl.BlockSpec((rows, Cp), lambda i: (i, 0)),
        scratch_shapes=[
            pltpu.VMEM((rows, 3 * Cp), jnp.bfloat16),              # staged qkv
            pltpu.VMEM((rows, Cp), jnp.bfloat16),                  # merged heads
        ],
        compiler_params=pltpu.CompilerParams(
            dimension_semantics=("parallel",),
            vmem_limit_bytes=vmem_limit),
    )(x_p, w_qkv_p, w_proj_p, b_proj_p)

    return out2[:, :C].reshape(B, T, C)


def temporal_attention_ref(x, w_qkv, w_proj, b_proj, temperature,
                           num_heads=NUM_HEADS):
    """Pure-JAX f32 reference mirroring the PyTorch forward exactly."""
    B, T, C = x.shape
    H = num_heads
    Dh = C // H
    qkv = x @ w_qkv                                              # (B, T, 3C)
    qkv = qkv.reshape(B, T, 3, H, Dh).transpose(2, 0, 3, 1, 4)   # (3, B, H, T, Dh)
    q, k, v = qkv[0], qkv[1], qkv[2]
    attn = jnp.einsum("bhtd,bhsd->bhts", q, k) * temperature.reshape(1, H, 1, 1)
    attn = jax.nn.softmax(attn, axis=-1)
    out = jnp.einsum("bhts,bhsd->bhtd", attn, v)                 # (B, H, T, Dh)
    out = out.transpose(0, 2, 1, 3).reshape(B, T, C)
    return out @ w_proj + b_proj


if __name__ == "__main__":
    B, T, C = 2, 8, 32
    H = NUM_HEADS
    assert C % H == 0

    key = jax.random.PRNGKey(0)
    kx, kqkv, kproj, kbias = jax.random.split(key, 4)

    x = jax.random.normal(kx, (B, T, C), dtype=jnp.float32)
    # Deterministic synthetic parameters (shapes from nn.Linear / nn.Parameter).
    w_qkv = jax.random.normal(kqkv, (C, 3 * C), dtype=jnp.float32) * 0.05   # qkv.weight.T
    w_proj = jax.random.normal(kproj, (C, C), dtype=jnp.float32) * 0.05     # proj.weight.T
    b_proj = jax.random.normal(kbias, (C,), dtype=jnp.float32) * 0.05       # proj.bias
    temperature = jnp.ones((H, 1, 1), dtype=jnp.float32)                    # ones(H,1,1)

    out = jax.block_until_ready(
        temporal_attention(x, w_qkv, w_proj, b_proj, temperature))
    ref = temporal_attention_ref(x, w_qkv, w_proj, b_proj, temperature)

    assert out.shape == (B, T, C)
    err = float(jnp.abs(out - ref).max())
    # Tolerance accounts for bf16 MXU operands and the approximate EUP
    # reciprocal used in the deferred softmax normalization.
    assert jnp.allclose(out, ref, atol=2e-2, rtol=2e-2), err
    print("KERNEL_OK")
</pallas_src>

<mosaic_0001>
module attributes {stable_mosaic.version = 11 : i64} {
  func.func @_temporal_attn_kernel(%arg0: i32, %arg1: memref<8x128xbf16, #tpu.memory_space<vmem>>, %arg2: memref<128x384xbf16, #tpu.memory_space<vmem>>, %arg3: memref<128x128xbf16, #tpu.memory_space<vmem>>, %arg4: memref<1x128xf32, #tpu.memory_space<vmem>>, %arg5: memref<8x128xf32, #tpu.memory_space<vmem>>, %arg6: memref<8x384xbf16, #tpu.memory_space<vmem>>, %arg7: memref<8x128xbf16, #tpu.memory_space<vmem>>) attributes {dimension_semantics = [#tpu.dimension_semantics<parallel>], iteration_bounds = array<i64: 2>, scalar_prefetch = 0 : i64, scratch_operands = 2 : i64, tpu.core_type = #tpu.core_type<tc>, window_params = [{transform_indices = @transform_0, window_bounds = array<i64: 8, 128>}, {pipeline_mode = #tpu.pipeline_mode<synchronous>, transform_indices = @transform_1, window_bounds = array<i64: 128, 384>}, {pipeline_mode = #tpu.pipeline_mode<synchronous>, transform_indices = @transform_2, window_bounds = array<i64: 128, 128>}, {pipeline_mode = #tpu.pipeline_mode<synchronous>, transform_indices = @transform_3, window_bounds = array<i64: 1, 128>}, {transform_indices = @transform_4, window_bounds = array<i64: 8, 128>}]} {
    %c0 = arith.constant 0 : index
    %c0_0 = arith.constant 0 : index
    %0 = vector.load %arg1[%c0, %c0_0] : memref<8x128xbf16, #tpu.memory_space<vmem>>, vector<8x128xbf16>
    %c0_1 = arith.constant 0 : index
    %c0_2 = arith.constant 0 : index
    %1 = vector.load %arg2[%c0_1, %c0_2] : memref<128x384xbf16, #tpu.memory_space<vmem>>, vector<128x384xbf16>
    %cst = arith.constant dense<0.000000e+00> : vector<8x384xf32>
    %2 = tpu.matmul %0, %1, %cst {dimension_numbers = #tpu.dot_dimension_numbers<[1], [0], [0], [1], [0, 0, 1, 1], [], []>} : vector<8x128xbf16>, vector<128x384xbf16>, vector<8x384xf32> -> vector<8x384xf32>
    %3 = arith.truncf %2 : vector<8x384xf32> to vector<8x384xbf16>
    %c0_3 = arith.constant 0 : index
    %c0_4 = arith.constant 0 : index
    %4 = vector.load %arg6[%c0_3, %c0_4] : memref<8x384xbf16, #tpu.memory_space<vmem>>, vector<8x384xbf16>
    tpu.vector_store %arg6[%c0_3, %c0_4], %3 {strides = array<i32>} : memref<8x384xbf16, #tpu.memory_space<vmem>>, vector<8x384xbf16>,
    %c0_i32 = arith.constant 0 : i32
    %c8_i32 = arith.constant 8 : i32
    %5 = arith.muli %c0_i32, %c8_i32 : i32
    %6 = tpu.assume_multiple %5, 8 : i32
    %7 = arith.index_cast %6 : i32 to index
    %c0_5 = arith.constant 0 : index
    %8 = vector.load %arg6[%7, %c0_5] : memref<8x384xbf16, #tpu.memory_space<vmem>>, vector<8x16xbf16>
    %9 = arith.index_cast %6 : i32 to index
    %c128 = arith.constant 128 : index
    %10 = vector.load %arg6[%9, %c128] : memref<8x384xbf16, #tpu.memory_space<vmem>>, vector<8x16xbf16>
    %11 = arith.index_cast %6 : i32 to index
    %c256 = arith.constant 256 : index
    %12 = vector.load %arg6[%11, %c256] : memref<8x384xbf16, #tpu.memory_space<vmem>>, vector<8x16xbf16>
    %cst_6 = arith.constant dense<0.000000e+00> : vector<8x8xf32>
    %13 = tpu.matmul %8, %10, %cst_6 {dimension_numbers = #tpu.dot_dimension_numbers<[1], [1], [0], [0], [0, 0, 1, 0], [], []>} : vector<8x16xbf16>, vector<8x16xbf16>, vector<8x8xf32> -> vector<8x8xf32>
    %cst_7 = arith.constant dense<0xFF800000> : vector<8xf32>
    %14 = vector.multi_reduction <maximumf>, %13, %cst_7 [1] : vector<8x8xf32> to vector<8xf32>
    %15 = vector.shape_cast %14 : vector<8xf32> to vector<8x1xf32>
    %16 = vector.broadcast %15 : vector<8x1xf32> to vector<8x8xf32>
    %17 = arith.subf %13, %16 : vector<8x8xf32>
    %18 = math.exp %17 : vector<8x8xf32>
    %cst_8 = arith.constant dense<0.000000e+00> : vector<8xf32>
    %19 = vector.multi_reduction <add>, %18, %cst_8 [1] : vector<8x8xf32> to vector<8xf32>
    %20 = vector.shape_cast %19 : vector<8xf32> to vector<8x1xf32>
    %21 = arith.truncf %18 : vector<8x8xf32> to vector<8x8xbf16>
    %cst_9 = arith.constant dense<0.000000e+00> : vector<8x16xf32>
    %22 = tpu.matmul %21, %12, %cst_9 {dimension_numbers = #tpu.dot_dimension_numbers<[1], [0], [0], [1], [0, 0, 1, 1], [], []>} : vector<8x8xbf16>, vector<8x16xbf16>, vector<8x16xf32> -> vector<8x16xf32>
    %23 = tpu.reciprocal %20 {approx = true} : vector<8x1xf32> -> vector<8x1xf32>
    %24 = vector.broadcast %23 : vector<8x1xf32> to vector<8x16xf32>
    %25 = arith.mulf %22, %24 : vector<8x16xf32>
    %26 = arith.index_cast %6 : i32 to index
    %c16 = arith.constant 16 : index
    %27 = vector.load %arg6[%26, %c16] : memref<8x384xbf16, #tpu.memory_space<vmem>>, vector<8x16xbf16>
    %28 = arith.index_cast %6 : i32 to index
    %c144 = arith.constant 144 : index
    %29 = vector.load %arg6[%28, %c144] : memref<8x384xbf16, #tpu.memory_space<vmem>>, vector<8x16xbf16>
    %30 = arith.index_cast %6 : i32 to index
    %c272 = arith.constant 272 : index
    %31 = vector.load %arg6[%30, %c272] : memref<8x384xbf16, #tpu.memory_space<vmem>>, vector<8x16xbf16>
    %cst_10 = arith.constant dense<0.000000e+00> : vector<8x8xf32>
    %32 = tpu.matmul %27, %29, %cst_10 {dimension_numbers = #tpu.dot_dimension_numbers<[1], [1], [0], [0], [0, 0, 1, 0], [], []>} : vector<8x16xbf16>, vector<8x16xbf16>, vector<8x8xf32> -> vector<8x8xf32>
    %cst_11 = arith.constant dense<0xFF800000> : vector<8xf32>
    %33 = vector.multi_reduction <maximumf>, %32, %cst_11 [1] : vector<8x8xf32> to vector<8xf32>
    %34 = vector.shape_cast %33 : vector<8xf32> to vector<8x1xf32>
    %35 = vector.broadcast %34 : vector<8x1xf32> to vector<8x8xf32>
    %36 = arith.subf %32, %35 : vector<8x8xf32>
    %37 = math.exp %36 : vector<8x8xf32>
    %cst_12 = arith.constant dense<0.000000e+00> : vector<8xf32>
    %38 = vector.multi_reduction <add>, %37, %cst_12 [1] : vector<8x8xf32> to vector<8xf32>
    %39 = vector.shape_cast %38 : vector<8xf32> to vector<8x1xf32>
    %40 = arith.truncf %37 : vector<8x8xf32> to vector<8x8xbf16>
    %cst_13 = arith.constant dense<0.000000e+00> : vector<8x16xf32>
    %41 = tpu.matmul %40, %31, %cst_13 {dimension_numbers = #tpu.dot_dimension_numbers<[1], [0], [0], [1], [0, 0, 1, 1], [], []>} : vector<8x8xbf16>, vector<8x16xbf16>, vector<8x16xf32> -> vector<8x16xf32>
    %42 = tpu.reciprocal %39 {approx = true} : vector<8x1xf32> -> vector<8x1xf32>
    %43 = vector.broadcast %42 : vector<8x1xf32> to vector<8x16xf32>
    %44 = arith.mulf %41, %43 : vector<8x16xf32>
    %45 = arith.index_cast %6 : i32 to index
    %c32 = arith.constant 32 : index
    %46 = vector.load %arg6[%45, %c32] : memref<8x384xbf16, #tpu.memory_space<vmem>>, vector<8x16xbf16>
    %47 = arith.index_cast %6 : i32 to index
    %c160 = arith.constant 160 : index
    %48 = vector.load %arg6[%47, %c160] : memref<8x384xbf16, #tpu.memory_space<vmem>>, vector<8x16xbf16>
    %49 = arith.index_cast %6 : i32 to index
    %c288 = arith.constant 288 : index
    %50 = vector.load %arg6[%49, %c288] : memref<8x384xbf16, #tpu.memory_space<vmem>>, vector<8x16xbf16>
    %cst_14 = arith.constant dense<0.000000e+00> : vector<8x8xf32>
    %51 = tpu.matmul %46, %48, %cst_14 {dimension_numbers = #tpu.dot_dimension_numbers<[1], [1], [0], [0], [0, 0, 1, 0], [], []>} : vector<8x16xbf16>, vector<8x16xbf16>, vector<8x8xf32> -> vector<8x8xf32>
    %cst_15 = arith.constant dense<0xFF800000> : vector<8xf32>
    %52 = vector.multi_reduction <maximumf>, %51, %cst_15 [1] : vector<8x8xf32> to vector<8xf32>
    %53 = vector.shape_cast %52 : vector<8xf32> to vector<8x1xf32>
    %54 = vector.broadcast %53 : vector<8x1xf32> to vector<8x8xf32>
    %55 = arith.subf %51, %54 : vector<8x8xf32>
    %56 = math.exp %55 : vector<8x8xf32>
    %cst_16 = arith.constant dense<0.000000e+00> : vector<8xf32>
    %57 = vector.multi_reduction <add>, %56, %cst_16 [1] : vector<8x8xf32> to vector<8xf32>
    %58 = vector.shape_cast %57 : vector<8xf32> to vector<8x1xf32>
    %59 = arith.truncf %56 : vector<8x8xf32> to vector<8x8xbf16>
    %cst_17 = arith.constant dense<0.000000e+00> : vector<8x16xf32>
    %60 = tpu.matmul %59, %50, %cst_17 {dimension_numbers = #tpu.dot_dimension_numbers<[1], [0], [0], [1], [0, 0, 1, 1], [], []>} : vector<8x8xbf16>, vector<8x16xbf16>, vector<8x16xf32> -> vector<8x16xf32>
    %61 = tpu.reciprocal %58 {approx = true} : vector<8x1xf32> -> vector<8x1xf32>
    %62 = vector.broadcast %61 : vector<8x1xf32> to vector<8x16xf32>
    %63 = arith.mulf %60, %62 : vector<8x16xf32>
    %64 = arith.index_cast %6 : i32 to index
    %c48 = arith.constant 48 : index
    %65 = vector.load %arg6[%64, %c48] : memref<8x384xbf16, #tpu.memory_space<vmem>>, vector<8x16xbf16>
    %66 = arith.index_cast %6 : i32 to index
    %c176 = arith.constant 176 : index
    %67 = vector.load %arg6[%66, %c176] : memref<8x384xbf16, #tpu.memory_space<vmem>>, vector<8x16xbf16>
    %68 = arith.index_cast %6 : i32 to index
    %c304 = arith.constant 304 : index
    %69 = vector.load %arg6[%68, %c304] : memref<8x384xbf16, #tpu.memory_space<vmem>>, vector<8x16xbf16>
    %cst_18 = arith.constant dense<0.000000e+00> : vector<8x8xf32>
    %70 = tpu.matmul %65, %67, %cst_18 {dimension_numbers = #tpu.dot_dimension_numbers<[1], [1], [0], [0], [0, 0, 1, 0], [], []>} : vector<8x16xbf16>, vector<8x16xbf16>, vector<8x8xf32> -> vector<8x8xf32>
    %cst_19 = arith.constant dense<0xFF800000> : vector<8xf32>
    %71 = vector.multi_reduction <maximumf>, %70, %cst_19 [1] : vector<8x8xf32> to vector<8xf32>
    %72 = vector.shape_cast %71 : vector<8xf32> to vector<8x1xf32>
    %73 = vector.broadcast %72 : vector<8x1xf32> to vector<8x8xf32>
    %74 = arith.subf %70, %73 : vector<8x8xf32>
    %75 = math.exp %74 : vector<8x8xf32>
    %cst_20 = arith.constant dense<0.000000e+00> : vector<8xf32>
    %76 = vector.multi_reduction <add>, %75, %cst_20 [1] : vector<8x8xf32> to vector<8xf32>
    %77 = vector.shape_cast %76 : vector<8xf32> to vector<8x1xf32>
    %78 = arith.truncf %75 : vector<8x8xf32> to vector<8x8xbf16>
    %cst_21 = arith.constant dense<0.000000e+00> : vector<8x16xf32>
    %79 = tpu.matmul %78, %69, %cst_21 {dimension_numbers = #tpu.dot_dimension_numbers<[1], [0], [0], [1], [0, 0, 1, 1], [], []>} : vector<8x8xbf16>, vector<8x16xbf16>, vector<8x16xf32> -> vector<8x16xf32>
    %80 = tpu.reciprocal %77 {approx = true} : vector<8x1xf32> -> vector<8x1xf32>
    %81 = vector.broadcast %80 : vector<8x1xf32> to vector<8x16xf32>
    %82 = arith.mulf %79, %81 : vector<8x16xf32>
    %83 = arith.index_cast %6 : i32 to index
    %c64 = arith.constant 64 : index
    %84 = vector.load %arg6[%83, %c64] : memref<8x384xbf16, #tpu.memory_space<vmem>>, vector<8x16xbf16>
    %85 = arith.index_cast %6 : i32 to index
    %c192 = arith.constant 192 : index
    %86 = vector.load %arg6[%85, %c192] : memref<8x384xbf16, #tpu.memory_space<vmem>>, vector<8x16xbf16>
    %87 = arith.index_cast %6 : i32 to index
    %c320 = arith.constant 320 : index
    %88 = vector.load %arg6[%87, %c320] : memref<8x384xbf16, #tpu.memory_space<vmem>>, vector<8x16xbf16>
    %cst_22 = arith.constant dense<0.000000e+00> : vector<8x8xf32>
    %89 = tpu.matmul %84, %86, %cst_22 {dimension_numbers = #tpu.dot_dimension_numbers<[1], [1], [0], [0], [0, 0, 1, 0], [], []>} : vector<8x16xbf16>, vector<8x16xbf16>, vector<8x8xf32> -> vector<8x8xf32>
    %cst_23 = arith.constant dense<0xFF800000> : vector<8xf32>
    %90 = vector.multi_reduction <maximumf>, %89, %cst_23 [1] : vector<8x8xf32> to vector<8xf32>
    %91 = vector.shape_cast %90 : vector<8xf32> to vector<8x1xf32>
    %92 = vector.broadcast %91 : vector<8x1xf32> to vector<8x8xf32>
    %93 = arith.subf %89, %92 : vector<8x8xf32>
    %94 = math.exp %93 : vector<8x8xf32>
    %cst_24 = arith.constant dense<0.000000e+00> : vector<8xf32>
    %95 = vector.multi_reduction <add>, %94, %cst_24 [1] : vector<8x8xf32> to vector<8xf32>
    %96 = vector.shape_cast %95 : vector<8xf32> to vector<8x1xf32>
    %97 = arith.truncf %94 : vector<8x8xf32> to vector<8x8xbf16>
    %cst_25 = arith.constant dense<0.000000e+00> : vector<8x16xf32>
    %98 = tpu.matmul %97, %88, %cst_25 {dimension_numbers = #tpu.dot_dimension_numbers<[1], [0], [0], [1], [0, 0, 1, 1], [], []>} : vector<8x8xbf16>, vector<8x16xbf16>, vector<8x16xf32> -> vector<8x16xf32>
    %99 = tpu.reciprocal %96 {approx = true} : vector<8x1xf32> -> vector<8x1xf32>
    %100 = vector.broadcast %99 : vector<8x1xf32> to vector<8x16xf32>
    %101 = arith.mulf %98, %100 : vector<8x16xf32>
    %102 = arith.index_cast %6 : i32 to index
    %c80 = arith.constant 80 : index
    %103 = vector.load %arg6[%102, %c80] : memref<8x384xbf16, #tpu.memory_space<vmem>>, vector<8x16xbf16>
    %104 = arith.index_cast %6 : i32 to index
    %c208 = arith.constant 208 : index
    %105 = vector.load %arg6[%104, %c208] : memref<8x384xbf16, #tpu.memory_space<vmem>>, vector<8x16xbf16>
    %106 = arith.index_cast %6 : i32 to index
    %c336 = arith.constant 336 : index
    %107 = vector.load %arg6[%106, %c336] : memref<8x384xbf16, #tpu.memory_space<vmem>>, vector<8x16xbf16>
    %cst_26 = arith.constant dense<0.000000e+00> : vector<8x8xf32>
    %108 = tpu.matmul %103, %105, %cst_26 {dimension_numbers = #tpu.dot_dimension_numbers<[1], [1], [0], [0], [0, 0, 1, 0], [], []>} : vector<8x16xbf16>, vector<8x16xbf16>, vector<8x8xf32> -> vector<8x8xf32>
    %cst_27 = arith.constant dense<0xFF800000> : vector<8xf32>
    %109 = vector.multi_reduction <maximumf>, %108, %cst_27 [1] : vector<8x8xf32> to vector<8xf32>
    %110 = vector.shape_cast %109 : vector<8xf32> to vector<8x1xf32>
    %111 = vector.broadcast %110 : vector<8x1xf32> to vector<8x8xf32>
    %112 = arith.subf %108, %111 : vector<8x8xf32>
    %113 = math.exp %112 : vector<8x8xf32>
    %cst_28 = arith.constant dense<0.000000e+00> : vector<8xf32>
    %114 = vector.multi_reduction <add>, %113, %cst_28 [1] : vector<8x8xf32> to vector<8xf32>
    %115 = vector.shape_cast %114 : vector<8xf32> to vector<8x1xf32>
    %116 = arith.truncf %113 : vector<8x8xf32> to vector<8x8xbf16>
    %cst_29 = arith.constant dense<0.000000e+00> : vector<8x16xf32>
    %117 = tpu.matmul %116, %107, %cst_29 {dimension_numbers = #tpu.dot_dimension_numbers<[1], [0], [0], [1], [0, 0, 1, 1], [], []>} : vector<8x8xbf16>, vector<8x16xbf16>, vector<8x16xf32> -> vector<8x16xf32>
    %118 = tpu.reciprocal %115 {approx = true} : vector<8x1xf32> -> vector<8x1xf32>
    %119 = vector.broadcast %118 : vector<8x1xf32> to vector<8x16xf32>
    %120 = arith.mulf %117, %119 : vector<8x16xf32>
    %121 = arith.index_cast %6 : i32 to index
    %c96 = arith.constant 96 : index
    %122 = vector.load %arg6[%121, %c96] : memref<8x384xbf16, #tpu.memory_space<vmem>>, vector<8x16xbf16>
    %123 = arith.index_cast %6 : i32 to index
    %c224 = arith.constant 224 : index
    %124 = vector.load %arg6[%123, %c224] : memref<8x384xbf16, #tpu.memory_space<vmem>>, vector<8x16xbf16>
    %125 = arith.index_cast %6 : i32 to index
    %c352 = arith.constant 352 : index
    %126 = vector.load %arg6[%125, %c352] : memref<8x384xbf16, #tpu.memory_space<vmem>>, vector<8x16xbf16>
    %cst_30 = arith.constant dense<0.000000e+00> : vector<8x8xf32>
    %127 = tpu.matmul %122, %124, %cst_30 {dimension_numbers = #tpu.dot_dimension_numbers<[1], [1], [0], [0], [0, 0, 1, 0], [], []>} : vector<8x16xbf16>, vector<8x16xbf16>, vector<8x8xf32> -> vector<8x8xf32>
    %cst_31 = arith.constant dense<0xFF800000> : vector<8xf32>
    %128 = vector.multi_reduction <maximumf>, %127, %cst_31 [1] : vector<8x8xf32> to vector<8xf32>
    %129 = vector.shape_cast %128 : vector<8xf32> to vector<8x1xf32>
    %130 = vector.broadcast %129 : vector<8x1xf32> to vector<8x8xf32>
    %131 = arith.subf %127, %130 : vector<8x8xf32>
    %132 = math.exp %131 : vector<8x8xf32>
    %cst_32 = arith.constant dense<0.000000e+00> : vector<8xf32>
    %133 = vector.multi_reduction <add>, %132, %cst_32 [1] : vector<8x8xf32> to vector<8xf32>
    %134 = vector.shape_cast %133 : vector<8xf32> to vector<8x1xf32>
    %135 = arith.truncf %132 : vector<8x8xf32> to vector<8x8xbf16>
    %cst_33 = arith.constant dense<0.000000e+00> : vector<8x16xf32>
    %136 = tpu.matmul %135, %126, %cst_33 {dimension_numbers = #tpu.dot_dimension_numbers<[1], [0], [0], [1], [0, 0, 1, 1], [], []>} : vector<8x8xbf16>, vector<8x16xbf16>, vector<8x16xf32> -> vector<8x16xf32>
    %137 = tpu.reciprocal %134 {approx = true} : vector<8x1xf32> -> vector<8x1xf32>
    %138 = vector.broadcast %137 : vector<8x1xf32> to vector<8x16xf32>
    %139 = arith.mulf %136, %138 : vector<8x16xf32>
    %140 = arith.index_cast %6 : i32 to index
    %c112 = arith.constant 112 : index
    %141 = vector.load %arg6[%140, %c112] : memref<8x384xbf16, #tpu.memory_space<vmem>>, vector<8x16xbf16>
    %142 = arith.index_cast %6 : i32 to index
    %c240 = arith.constant 240 : index
    %143 = vector.load %arg6[%142, %c240] : memref<8x384xbf16, #tpu.memory_space<vmem>>, vector<8x16xbf16>
    %144 = arith.index_cast %6 : i32 to index
    %c368 = arith.constant 368 : index
    %145 = vector.load %arg6[%144, %c368] : memref<8x384xbf16, #tpu.memory_space<vmem>>, vector<8x16xbf16>
    %cst_34 = arith.constant dense<0.000000e+00> : vector<8x8xf32>
    %146 = tpu.matmul %141, %143, %cst_34 {dimension_numbers = #tpu.dot_dimension_numbers<[1], [1], [0], [0], [0, 0, 1, 0], [], []>} : vector<8x16xbf16>, vector<8x16xbf16>, vector<8x8xf32> -> vector<8x8xf32>
    %cst_35 = arith.constant dense<0xFF800000> : vector<8xf32>
    %147 = vector.multi_reduction <maximumf>, %146, %cst_35 [1] : vector<8x8xf32> to vector<8xf32>
    %148 = vector.shape_cast %147 : vector<8xf32> to vector<8x1xf32>
    %149 = vector.broadcast %148 : vector<8x1xf32> to vector<8x8xf32>
    %150 = arith.subf %146, %149 : vector<8x8xf32>
    %151 = math.exp %150 : vector<8x8xf32>
    %cst_36 = arith.constant dense<0.000000e+00> : vector<8xf32>
    %152 = vector.multi_reduction <add>, %151, %cst_36 [1] : vector<8x8xf32> to vector<8xf32>
    %153 = vector.shape_cast %152 : vector<8xf32> to vector<8x1xf32>
    %154 = arith.truncf %151 : vector<8x8xf32> to vector<8x8xbf16>
    %cst_37 = arith.constant dense<0.000000e+00> : vector<8x16xf32>
    %155 = tpu.matmul %154, %145, %cst_37 {dimension_numbers = #tpu.dot_dimension_numbers<[1], [0], [0], [1], [0, 0, 1, 1], [], []>} : vector<8x8xbf16>, vector<8x16xbf16>, vector<8x16xf32> -> vector<8x16xf32>
    %156 = tpu.reciprocal %153 {approx = true} : vector<8x1xf32> -> vector<8x1xf32>
    %157 = vector.broadcast %156 : vector<8x1xf32> to vector<8x16xf32>
    %158 = arith.mulf %155, %157 : vector<8x16xf32>
    %159 = tpu.concatenate %25, %44, %63, %82, %101, %120, %139, %158 in 1 : vector<8x16xf32>, vector<8x16xf32>, vector<8x16xf32>, vector<8x16xf32>, vector<8x16xf32>, vector<8x16xf32>, vector<8x16xf32>, vector<8x16xf32> -> vector<8x128xf32>
    %160 = arith.truncf %159 : vector<8x128xf32> to vector<8x128xbf16>
    %161 = arith.index_cast %6 : i32 to index
    %c0_38 = arith.constant 0 : index
    %162 = vector.load %arg7[%161, %c0_38] : memref<8x128xbf16, #tpu.memory_space<vmem>>, vector<8x128xbf16>
    tpu.vector_store %arg7[%161, %c0_38], %160 {strides = array<i32>} : memref<8x128xbf16, #tpu.memory_space<vmem>>, vector<8x128xbf16>,
    %c1_i32 = arith.constant 1 : i32
    %c0_39 = arith.constant 0 : index
    %c0_40 = arith.constant 0 : index
    %163 = vector.load %arg7[%c0_39, %c0_40] : memref<8x128xbf16, #tpu.memory_space<vmem>>, vector<8x128xbf16>
    %c0_41 = arith.constant 0 : index
    %c0_42 = arith.constant 0 : index
    %164 = vector.load %arg3[%c0_41, %c0_42] : memref<128x128xbf16, #tpu.memory_space<vmem>>, vector<128x128xbf16>
    %cst_43 = arith.constant dense<0.000000e+00> : vector<8x128xf32>
    %165 = tpu.matmul %163, %164, %cst_43 {dimension_numbers = #tpu.dot_dimension_numbers<[1], [0], [0], [1], [0, 0, 1, 1], [], []>} : vector<8x128xbf16>, vector<128x128xbf16>, vector<8x128xf32> -> vector<8x128xf32>
    %c0_44 = arith.constant 0 : index
    %c0_45 = arith.constant 0 : index
    %166 = vector.load %arg4[%c0_44, %c0_45] : memref<1x128xf32, #tpu.memory_space<vmem>>, vector<1x128xf32>
    %167 = vector.broadcast %166 : vector<1x128xf32> to vector<8x128xf32>
    %168 = arith.addf %165, %167 : vector<8x128xf32>
    %c0_46 = arith.constant 0 : index
    %c0_47 = arith.constant 0 : index
    %169 = vector.load %arg5[%c0_46, %c0_47] : memref<8x128xf32, #tpu.memory_space<vmem>>, vector<8x128xf32>
    tpu.vector_store %arg5[%c0_46, %c0_47], %168 {strides = array<i32>} : memref<8x128xf32, #tpu.memory_space<vmem>>, vector<8x128xf32>,
    return
  }
  func.func @transform_0(%arg0: i32) -> (i32, i32) {
    %c0_i32 = arith.constant 0 : i32
    %c0_i32_0 = arith.constant 0 : i32
    return %arg0, %c0_i32 : i32, i32
  }
  func.func @transform_1(%arg0: i32) -> (i32, i32) {
    %c0_i32 = arith.constant 0 : i32
    %c0_i32_0 = arith.constant 0 : i32
    %c0_i32_1 = arith.constant 0 : i32
    return %c0_i32, %c0_i32_0 : i32, i32
  }
  func.func @transform_2(%arg0: i32) -> (i32, i32) {
    %c0_i32 = arith.constant 0 : i32
    %c0_i32_0 = arith.constant 0 : i32
    %c0_i32_1 = arith.constant 0 : i32
    return %c0_i32, %c0_i32_0 : i32, i32
  }
  func.func @transform_3(%arg0: i32) -> (i32, i32) {
    %c0_i32 = arith.constant 0 : i32
    %c0_i32_0 = arith.constant 0 : i32
    %c0_i32_1 = arith.constant 0 : i32
    return %c0_i32, %c0_i32_0 : i32, i32
  }
  func.func @transform_4(%arg0: i32) -> (i32, i32) {
    %c0_i32 = arith.constant 0 : i32
    %c0_i32_0 = arith.constant 0 : i32
    return %arg0, %c0_i32 : i32, i32
  }
}

</mosaic_0001>

<llo_original>
// kernel: tpu_custom_call.1
$region0: #{tpu_custom_call.1}
  #allocation0 [shape = 'u32[]', space=smem, size = 0x4, offset = 0x4, fixed_abs, tag = 'smem constant byte address 0x4 - core index']
  #allocation1 [shape = 'u32[144,128]{1,0:T(1,128)}', space=vmem, size = 0x12000, scoped, tag = 'internal scratch']
  #allocation2 [shape = 'bf16[8,384]{1,0:T(8,128)(2,1)}', space=vmem, size = 0x1800, scoped, tag = 'scratch operand']
  #allocation3 [shape = 'bf16[8,128]{1,0:T(8,128)(2,1)}', space=vmem, size = 0x800, scoped, tag = 'scratch operand']
  %s0 = inlined_call_operand.hbm [shape: bf16[16,128], index: 0, kind: input, shape index: {}]
  %s1 = inlined_call_operand.hbm [shape: bf16[128,384], index: 1, kind: input, shape index: {}]
  %s2 = inlined_call_operand.hbm [shape: bf16[128,128], index: 2, kind: input, shape index: {}]
  %s3 = inlined_call_operand.vmem [shape: f32[1,128], index: 3, kind: input, shape index: {}]
  %s4 = inlined_call_operand.hbm [shape: f32[16,128], index: 4, kind: output, shape index: {}]
  %s5 = sld [smem:[#allocation0]]
  $region61: #{tpu_custom_call.1} parent=0
    _
  %s7 = ssub.s32 1, %s5
  %s8 = scalar_select 0, %s7, %s5
  $region1: #{tpu_custom_call.1} parent=0
    #allocation4 [shape = 'u8[4096]{0}', space=vmem, size = 0x1000, scoped, tag = 'input window, operand 0']
    #allocation5 [shape = 's32[2]{0}', space=sflag, size = 0x8, scoped, tag = 'scoped memory for tpu_custom_call.1']
    #allocation6 [shape = 's32[2]{0}', space=sflag, size = 0x8, scoped, tag = 'scoped memory for tpu_custom_call.1']
    #allocation7 [shape = 'u8[98304]{0}', space=vmem, size = 0x18000, scoped, tag = 'input window, operand 1, single buffered']
    #allocation8 [shape = 's32[1]{0}', space=sflag, size = 0x4, scoped, tag = 'scoped memory for tpu_custom_call.1']
    #allocation9 [shape = 'u8[32768]{0}', space=vmem, size = 0x8000, scoped, tag = 'input window, operand 2, single buffered']
    #allocation10 [shape = 'u8[8192]{0}', space=vmem, size = 0x2000, scoped, tag = 'output window, operand 0']
    %9 = vsyncpa [#allocation5], 0
    %s10 = scalar_lea.sflag [#allocation5], 1
    %11 = vsyncpa %s10, 0
    %12 = vsyncpa [#allocation8], 0
    %13 = vsyncpa [#allocation6], 0
    %s14 = scalar_lea.sflag [#allocation6], 1
    %15 = vsyncpa %s14, 0
    loop: start=0, step=1, limit=4
    $region2: #{tpu_custom_call.1} parent=1 // loop_pre_header
      _
    $region3: #{tpu_custom_call.1} parent=1 // loop_header
      %s17 = sphi 0, %s21
      %p18 = scmp.ge.s32.totalorder %s17, 4
      %s27 = sphi 0, %s29
      %s30 = sphi 0, %s27
      %s31 = sphi 0, %s30
      %s47 = sphi 0, %s31
      %s51 = sphi 0, %s51
      %s53 = sphi 0, %s51
      %s54 = sphi 0, %s53
      %s68 = sphi 0, %s54
      %s72 = sphi 0, %s72
      %s74 = sphi 0, %s72
      %s75 = sphi 0, %s74
      %s89 = sphi 0, %s75
      %s93 = sphi 0, %s93
      %s95 = sphi 0, %s93
      %s96 = sphi 0, %s95
      %s110 = sphi 0, %s96
      %s116 = sphi 0, %s118
      %s119 = sphi 0, %s116
      %s120 = sphi 0, %s119
      %s136 = sphi 0, %s120
    $region4: #{tpu_custom_call.1} parent=1 // loop_header_branch
      %20 = sbr.rel (%p18) target = $region8
    $region5: #{tpu_custom_call.1} parent=1 // loop_body
      %s22 = ssub.s32 %s17, 1
      %s23 = ssub.s32 %s17, 2
      %s24 = sadd.s32 %s17, 1
      %s25 = ssub.s32 %s17, %s24
      %p26 = scmp.eq.s32.totalorder %s25, 0
      %s28 = sadd.s32 %s27, 1
      %s29 = scalar_select %p26, %s27, %s28
      %p32 = pneg %p26
      %p33 = scmp.eq.s32.totalorder %s17, 1
      %p34 = por %p32, %p33
      %p35 = scmp.ne.s32.totalorder %s27, %s30
      %p36 = scmp.eq.s32.totalorder %s17, 0
      %p37 = por %p35, %p36
      %p38 = scmp.ne.s32.totalorder %s27, %s30
      %p39 = scmp.eq.s32.totalorder %s22, 1
      %p40 = por %p38, %p39
      %p41 = scmp.ne.s32.totalorder %s30, %s31
      %p42 = scmp.eq.s32.totalorder %s22, 0
      %p43 = por %p41, %p42
      %p44 = scmp.ne.s32.totalorder %s30, %s31
      %p45 = scmp.eq.s32.totalorder %s23, 1
      %p46 = por %p44, %p45
      %p48 = scmp.ne.s32.totalorder %s31, %s47
      %p49 = scmp.eq.s32.totalorder %s23, 0
      %p50 = por %p48, %p49
      %s52 = sadd.s32 %s51, 1
      %p55 = scmp.eq.s32.totalorder %s17, 1
      %p56 = scmp.ne.s32.totalorder %s51, %s53
      %p57 = scmp.eq.s32.totalorder %s17, 0
      %p58 = por %p56, %p57
      %p59 = scmp.ne.s32.totalorder %s51, %s53
      %p60 = scmp.eq.s32.totalorder %s22, 1
      %p61 = por %p59, %p60
      %p62 = scmp.ne.s32.totalorder %s53, %s54
      %p63 = scmp.eq.s32.totalorder %s22, 0
      %p64 = por %p62, %p63
      %p65 = scmp.ne.s32.totalorder %s53, %s54
      %p66 = scmp.eq.s32.totalorder %s23, 1
      %p67 = por %p65, %p66
      %p69 = scmp.ne.s32.totalorder %s54, %s68
      %p70 = scmp.eq.s32.totalorder %s23, 0
      %p71 = por %p69, %p70
      %s73 = sadd.s32 %s72, 1
      %p76 = scmp.eq.s32.totalorder %s17, 1
      %p77 = scmp.ne.s32.totalorder %s72, %s74
      %p78 = scmp.eq.s32.totalorder %s17, 0
      %p79 = por %p77, %p78
      %p80 = scmp.ne.s32.totalorder %s72, %s74
      %p81 = scmp.eq.s32.totalorder %s22, 1
      %p82 = por %p80, %p81
      %p83 = scmp.ne.s32.totalorder %s74, %s75
      %p84 = scmp.eq.s32.totalorder %s22, 0
      %p85 = por %p83, %p84
      %p86 = scmp.ne.s32.totalorder %s74, %s75
      %p87 = scmp.eq.s32.totalorder %s23, 1
      %p88 = por %p86, %p87
      %p90 = scmp.ne.s32.totalorder %s75, %s89
      %p91 = scmp.eq.s32.totalorder %s23, 0
      %p92 = por %p90, %p91
      %s94 = sadd.s32 %s93, 1
      %p97 = scmp.eq.s32.totalorder %s17, 1
      %p98 = scmp.ne.s32.totalorder %s93, %s95
      %p99 = scmp.eq.s32.totalorder %s17, 0
      %p100 = por %p98, %p99
      %p101 = scmp.ne.s32.totalorder %s93, %s95
      %p102 = scmp.eq.s32.totalorder %s22, 1
      %p103 = por %p101, %p102
      %p104 = scmp.ne.s32.totalorder %s95, %s96
      %p105 = scmp.eq.s32.totalorder %s22, 0
      %p106 = por %p104, %p105
      %p107 = scmp.ne.s32.totalorder %s95, %s96
      %p108 = scmp.eq.s32.totalorder %s23, 1
      %p109 = por %p107, %p108
      %p111 = scmp.ne.s32.totalorder %s96, %s110
      %p112 = scmp.eq.s32.totalorder %s23, 0
      %p113 = por %p111, %p112
      %s114 = ssub.s32 %s17, %s24
      %p115 = scmp.eq.s32.totalorder %s114, 0
      %s117 = sadd.s32 %s116, 1
      %s118 = scalar_select %p115, %s116, %s117
      %p121 = pneg %p115
      %p122 = scmp.eq.s32.totalorder %s17, 1
      %p123 = por %p121, %p122
      %p124 = scmp.ne.s32.totalorder %s116, %s119
      %p125 = scmp.eq.s32.totalorder %s17, 0
      %p126 = por %p124, %p125
      %p127 = scmp.ne.s32.totalorder %s116, %s119
      %p128 = scmp.eq.s32.totalorder %s22, 1
      %p129 = por %p127, %p128
      %p130 = scmp.ne.s32.totalorder %s119, %s120
      %p131 = scmp.eq.s32.totalorder %s22, 0
      %p132 = por %p130, %p131
      %p133 = scmp.ne.s32.totalorder %s119, %s120
      %p134 = scmp.eq.s32.totalorder %s23, 1
      %p135 = por %p133, %p134
      %p137 = scmp.ne.s32.totalorder %s120, %s136
      %p138 = scmp.eq.s32.totalorder %s23, 0
      %p139 = por %p137, %p138
      %p140 = scmp.le.s32.totalorder 1, %s17
      %p141 = scmp.lt.s32.totalorder %s17, 3
      %p142 = pnand %p140, %p141
      %p143 = pneg %p142
      // Predicated region
      $region9: #{tpu_custom_call.1} parent=5 // pred_check
        _
      $region10: #{tpu_custom_call.1} parent=5 // pred_check_branch
        %145 = sbr.rel (%p142) target = $region12
      $region11: #{tpu_custom_call.1} parent=5 // pred_region
        %s146 = ssub.s32 %s17, 1
        // Predicated region
        $region13: #{tpu_custom_call.1} parent=11 // pred_check
          %p147 = pneg %p64
        $region14: #{tpu_custom_call.1} parent=11 // pred_check_branch
          %149 = sbr.rel (%p147) target = $region16
        $region15: #{tpu_custom_call.1} parent=11 // pred_region
          %s151 = ssub.s32 3072, 3072
          %152 = vsyncadd [#allocation8], %s151
          %s153 = sshll.u32 [#allocation7], 4
          %s154 = int_to_ptr.vmem [resolvable:$true] %s153
          %159 = dma.hbm_to_vmem [thread:$0]  %s1, 3072, %s154, [#allocation8], 192, 192, 12
        $region16: #{tpu_custom_call.1} parent=11 // pred_fallthru
          _
        // Predicated region
        $region17: #{tpu_custom_call.1} parent=11 // pred_check
          %p160 = pneg %p85
        $region18: #{tpu_custom_call.1} parent=11 // pred_check_branch
          %162 = sbr.rel (%p160) target = $region20
        $region19: #{tpu_custom_call.1} parent=11 // pred_region
          %s164 = ssub.s32 1024, 1024
          %165 = vsyncadd [#allocation8], %s164
          %s166 = sshll.u32 [#allocation9], 4
          %s167 = int_to_ptr.vmem [resolvable:$true] %s166
          %172 = dma.hbm_to_vmem [thread:$0]  %s2, 1024, %s167, [#allocation8], 64, 64, 4
        $region20: #{tpu_custom_call.1} parent=11 // pred_fallthru
          _
        // Predicated region
        $region21: #{tpu_custom_call.1} parent=11 // pred_check
          %p173 = pneg %p106
        $region22: #{tpu_custom_call.1} parent=11 // pred_check_branch
          %175 = sbr.rel (%p173) target = $region24
        $region23: #{tpu_custom_call.1} parent=11 // pred_region
          _
        $region24: #{tpu_custom_call.1} parent=11 // pred_fallthru
          _
      $region12: #{tpu_custom_call.1} parent=5 // pred_fallthru
        _
      %p176 = scmp.lt.s32.totalorder %s17, 2
      // Predicated region
      $region25: #{tpu_custom_call.1} parent=5 // pred_check
        %p177 = pneg %p176
      $region26: #{tpu_custom_call.1} parent=5 // pred_check_branch
        %179 = sbr.rel (%p177) target = $region28
      $region27: #{tpu_custom_call.1} parent=5 // pred_region
        // Predicated region
        $region29: #{tpu_custom_call.1} parent=27 // pred_check
          %p180 = pneg %p37
        $region30: #{tpu_custom_call.1} parent=27 // pred_check_branch
          %182 = sbr.rel (%p180) target = $region32
        $region31: #{tpu_custom_call.1} parent=27 // pred_region
          %s183 = sand.u32 %s27, 1
          %s184 = scalar_lea.sflag [#allocation5], %s183
          %s185 = sand.u32 %s27, 1
          %s186 = smul.addr %s185, 4
          %s187 = scalar_lea.vmem [#allocation4], %s186
          %s189 = ssub.s32 64, 64
          %190 = vsyncadd %s184, %s189
          %s191 = smul.addr %s17, 64
          %s192 = scalar_lea.hbm %s0, %s191
          %s194 = sshll.u32 %s187, 4
          %s195 = int_to_ptr.vmem [resolvable:$true] %s194
          %197 = dma.hbm_to_vmem [thread:$0]  %s192, 64, %s195, %s184
        $region32: #{tpu_custom_call.1} parent=27 // pred_fallthru
          _
      $region28: #{tpu_custom_call.1} parent=5 // pred_fallthru
        _
      %p198 = scmp.le.s32.totalorder 1, %s17
      %p199 = scmp.lt.s32.totalorder %s17, 3
      %p200 = pnand %p198, %p199
      %p201 = pneg %p200
      // Predicated region
      $region33: #{tpu_custom_call.1} parent=5 // pred_check
        _
      $region34: #{tpu_custom_call.1} parent=5 // pred_check_branch
        %203 = sbr.rel (%p200) target = $region36
      $region35: #{tpu_custom_call.1} parent=5 // pred_region
        %s204 = ssub.s32 %s17, 1
        %s205 = sand.u32 %s30, 1
        %s206 = scalar_lea.sflag [#allocation5], %s205
        %s207 = sand.u32 %s30, 1
        %s208 = smul.addr %s207, 4
        %s209 = scalar_lea.vmem [#allocation4], %s208
        // Predicated region
        $region37: #{tpu_custom_call.1} parent=35 // pred_check
          %p210 = pneg %p43
        $region38: #{tpu_custom_call.1} parent=35 // pred_check_branch
          %212 = sbr.rel (%p210) target = $region40
        $region39: #{tpu_custom_call.1} parent=35 // pred_region
          %213 = dma.done %s206, 64
        $region40: #{tpu_custom_call.1} parent=35 // pred_fallthru
          _
        // Predicated region
        $region41: #{tpu_custom_call.1} parent=35 // pred_check
          %p214 = pneg %p64
        $region42: #{tpu_custom_call.1} parent=35 // pred_check_branch
          %216 = sbr.rel (%p214) target = $region44
        $region43: #{tpu_custom_call.1} parent=35 // pred_region
          %217 = dma.done [#allocation8], 3072
        $region44: #{tpu_custom_call.1} parent=35 // pred_fallthru
          _
        // Predicated region
        $region45: #{tpu_custom_call.1} parent=35 // pred_check
          %p218 = pneg %p85
        $region46: #{tpu_custom_call.1} parent=35 // pred_check_branch
          %220 = sbr.rel (%p218) target = $region48
        $region47: #{tpu_custom_call.1} parent=35 // pred_region
          %221 = dma.done [#allocation8], 1024
        $region48: #{tpu_custom_call.1} parent=35 // pred_fallthru
          _
        %s222 = sand.u32 %s30, 1
        %s223 = scalar_lea.sflag [#allocation5], %s222
        %s224 = sand.u32 %s30, 1
        %s225 = smul.addr %s224, 4
        %s226 = scalar_lea.vmem [#allocation4], %s225
        %p227 = pneg %p43
        %p228 = pneg %p40
        %p229 = pneg %p64
        %p230 = pneg %p61
        %p231 = pneg %p85
        %p232 = pneg %p82
        %p233 = pneg %p106
        %p234 = pneg %p103
        %p235 = pneg %p132
        %p236 = pneg %p129
        %s237 = sand.u32 %s119, 1
        %s238 = scalar_lea.sflag [#allocation6], %s237
        %s239 = sand.u32 %s119, 1
        %s240 = smul.addr %s239, 8
        %s241 = scalar_lea.vmem [#allocation10], %s240
        %v243 = vld [vmem:[%s209] sm:$0xf]
        %v244 = vld [vmem:[#allocation7] sm:$0xff]
        %v245 = vld [vmem:[#allocation7 + $0x8] sm:$0xf]
        %v246 = vld [vmem:[#allocation7 + $0xc] sm:$0xff]
        %v247 = vld [vmem:[#allocation7 + $0x14] sm:$0xf]
        %v248 = vld [vmem:[#allocation7 + $0x18] sm:$0xff]
        %v249 = vld [vmem:[#allocation7 + $0x20] sm:$0xf]
        %v250 = vld [vmem:[#allocation7 + $0x24] sm:$0xff]
        %v251 = vld [vmem:[#allocation7 + $0x2c] sm:$0xf]
        %v252 = vld [vmem:[#allocation7 + $0x30] sm:$0xff]
        %v253 = vld [vmem:[#allocation7 + $0x38] sm:$0xf]
        %v254 = vld [vmem:[#allocation7 + $0x3c] sm:$0xff]
        %v255 = vld [vmem:[#allocation7 + $0x44] sm:$0xf]
        %v256 = vld [vmem:[#allocation7 + $0x48] sm:$0xff]
        %v257 = vld [vmem:[#allocation7 + $0x50] sm:$0xf]
        %v258 = vld [vmem:[#allocation7 + $0x54] sm:$0xff]
        %v259 = vld [vmem:[#allocation7 + $0x5c] sm:$0xf]
        %v260 = vld [vmem:[#allocation7 + $0x60] sm:$0xff]
        %v261 = vld [vmem:[#allocation7 + $0x68] sm:$0xf]
        %v262 = vld [vmem:[#allocation7 + $0x6c] sm:$0xff]
        %v263 = vld [vmem:[#allocation7 + $0x74] sm:$0xf]
        %v264 = vld [vmem:[#allocation7 + $0x78] sm:$0xff]
        %v265 = vld [vmem:[#allocation7 + $0x80] sm:$0xf]
        %v266 = vld [vmem:[#allocation7 + $0x84] sm:$0xff]
        %v267 = vld [vmem:[#allocation7 + $0x8c] sm:$0xf]
        %v268 = vld [vmem:[#allocation7 + $0x90] sm:$0xff]
        %v269 = vld [vmem:[#allocation7 + $0x98] sm:$0xf]
        %v270 = vld [vmem:[#allocation7 + $0x9c] sm:$0xff]
        %v271 = vld [vmem:[#allocation7 + $0xa4] sm:$0xf]
        %v272 = vld [vmem:[#allocation7 + $0xa8] sm:$0xff]
        %v273 = vld [vmem:[#allocation7 + $0xb0] sm:$0xf]
        %v274 = vld [vmem:[#allocation7 + $0xb4] sm:$0xff]
        %v275 = vld [vmem:[#allocation7 + $0xbc] sm:$0xf]
        %v308 = vunpack.c.l.b16 %v244
        %v309 = vunpack.c.h.b16 %v244
        %v310 = vunpack.c.l.b16 %v245
        %v311 = vunpack.c.l.b16 %v246
        %v312 = vunpack.c.h.b16 %v246
        %v313 = vunpack.c.l.b16 %v247
        %v314 = vunpack.c.l.b16 %v248
        %v315 = vunpack.c.h.b16 %v248
        %v316 = vunpack.c.l.b16 %v249
        %v317 = vunpack.c.l.b16 %v250
        %v318 = vunpack.c.h.b16 %v250
        %v319 = vunpack.c.l.b16 %v251
        %v320 = vunpack.c.l.b16 %v252
        %v321 = vunpack.c.h.b16 %v252
        %v322 = vunpack.c.l.b16 %v253
        %v323 = vunpack.c.l.b16 %v254
        %v324 = vunpack.c.h.b16 %v254
        %v325 = vunpack.c.l.b16 %v255
        %v326 = vunpack.c.l.b16 %v256
        %v327 = vunpack.c.h.b16 %v256
        %v328 = vunpack.c.l.b16 %v257
        %v329 = vunpack.c.l.b16 %v258
        %v330 = vunpack.c.h.b16 %v258
        %v331 = vunpack.c.l.b16 %v259
        %v332 = vunpack.c.l.b16 %v260
        %v333 = vunpack.c.h.b16 %v260
        %v334 = vunpack.c.l.b16 %v261
        %v335 = vunpack.c.l.b16 %v262
        %v336 = vunpack.c.h.b16 %v262
        %v337 = vunpack.c.l.b16 %v263
        %v338 = vunpack.c.l.b16 %v264
        %v339 = vunpack.c.h.b16 %v264
        %v340 = vunpack.c.l.b16 %v265
        %v341 = vunpack.c.l.b16 %v266
        %v342 = vunpack.c.h.b16 %v266
        %v343 = vunpack.c.l.b16 %v267
        %v344 = vunpack.c.l.b16 %v268
        %v345 = vunpack.c.h.b16 %v268
        %v346 = vunpack.c.l.b16 %v269
        %v347 = vunpack.c.l.b16 %v270
        %v348 = vunpack.c.h.b16 %v270
        %v349 = vunpack.c.l.b16 %v271
        %v350 = vunpack.c.l.b16 %v272
        %v351 = vunpack.c.h.b16 %v272
        %v352 = vunpack.c.l.b16 %v273
        %v353 = vunpack.c.l.b16 %v274
        %v354 = vunpack.c.h.b16 %v274
        %v355 = vunpack.c.l.b16 %v275
        %v356 = vpack.c.b16 %v311, %v308
        %v357 = vpack.c.b16 %v312, %v309
        %v358 = vpack.c.b16 %v313, %v310
        %v359 = vpack.c.b16 %v317, %v314
        %v360 = vpack.c.b16 %v318, %v315
        %v361 = vpack.c.b16 %v319, %v316
        %v362 = vpack.c.b16 %v323, %v320
        %v363 = vpack.c.b16 %v324, %v321
        %v364 = vpack.c.b16 %v325, %v322
        %v365 = vpack.c.b16 %v329, %v326
        %v366 = vpack.c.b16 %v330, %v327
        %v367 = vpack.c.b16 %v331, %v328
        %v368 = vpack.c.b16 %v335, %v332
        %v369 = vpack.c.b16 %v336, %v333
        %v370 = vpack.c.b16 %v337, %v334
        %v371 = vpack.c.b16 %v341, %v338
        %v372 = vpack.c.b16 %v342, %v339
        %v373 = vpack.c.b16 %v343, %v340
        %v374 = vpack.c.b16 %v347, %v344
        %v375 = vpack.c.b16 %v348, %v345
        %v376 = vpack.c.b16 %v349, %v346
        %v377 = vpack.c.b16 %v353, %v350
        %v378 = vpack.c.b16 %v354, %v351
        %v379 = vpack.c.b16 %v355, %v352
        %404 = vmatprep.subr.bf16.mxu0 %v357
        %405 = vmatpush1.bf16.msra.mxu0 %v356
        %406 = vmatprep.subr.bf16.mxu0 %v360
        %407 = vmatpush1.bf16.msra.mxu0 %v359
        %408 = vmatprep.subr.bf16.mxu0 %v363
        %409 = vmatpush1.bf16.msra.mxu0 %v362
        %410 = vmatprep.subr.bf16.mxu0 %v366
        %411 = vmatpush1.bf16.msra.mxu0 %v365
        %412 = vmatprep.subr.bf16.mxu0 %v369
        %413 = vmatpush1.bf16.msra.mxu0 %v368
        %414 = vmatprep.subr.bf16.mxu0 %v372
        %415 = vmatpush1.bf16.msra.mxu0 %v371
        %416 = vmatprep.subr.bf16.mxu0 %v375
        %417 = vmatpush1.bf16.msra.mxu0 %v374
        %418 = vmatprep.subr.bf16.mxu0 %v378
        %419 = vmatpush1.bf16.msra.mxu0 %v377
        %420 = vmatprep.subr.bf16.mxu0 0
        %421 = vmatpush1.bf16.msra.mxu0 0
        %422 = vmatprep.subr.bf16.mxu0 0
        %423 = vmatpush1.bf16.msra.mxu0 0
        %424 = vmatprep.subr.bf16.mxu0 0
        %425 = vmatpush1.bf16.msra.mxu0 0
        %426 = vmatprep.subr.bf16.mxu0 0
        %427 = vmatpush1.bf16.msra.mxu0 0
        %428 = vmatprep.subr.bf16.mxu0 0
        %429 = vmatpush1.bf16.msra.mxu0 0
        %430 = vmatprep.subr.bf16.mxu0 0
        %431 = vmatpush1.bf16.msra.mxu0 0
        %432 = vmatprep.subr.bf16.mxu0 0
        %433 = vmatpush1.bf16.msra.mxu0 0
        %434 = vmatprep.subr.bf16.mxu0 0
        %435 = vmatpush1.bf16.msra.mxu0 0
        %436 = vmatprep.mubr.bf16.mxu0 0
        %437 = vmatmul.mubr.bf16.gmra.mrb[0].mxu0 %v243
        %v438 = vpop.f32.mrb[0].mxu0
        %v439 = vadd.f32 0.0, %v438
        %v440 = vpop.f32.mrb[0].mxu0
        %v441 = vadd.f32 0.0, %v440
        %v442 = vpop.f32.mrb[0].mxu0
        %v443 = vpop.f32.mrb[0].mxu0
        %444 = vdwg.mxu0
        %445 = vmatprep.subr.bf16.mxu0 0
        %446 = vmatpush1.bf16.msra.mxu0 %v358
        %447 = vmatprep.subr.bf16.mxu0 0
        %448 = vmatpush1.bf16.msra.mxu0 %v361
        %449 = vmatprep.subr.bf16.mxu0 0
        %450 = vmatpush1.bf16.msra.mxu0 %v364
        %451 = vmatprep.subr.bf16.mxu0 0
        %452 = vmatpush1.bf16.msra.mxu0 %v367
        %453 = vmatprep.subr.bf16.mxu0 0
        %454 = vmatpush1.bf16.msra.mxu0 %v370
        %455 = vmatprep.subr.bf16.mxu0 0
        %456 = vmatpush1.bf16.msra.mxu0 %v373
        %457 = vmatprep.subr.bf16.mxu0 0
        %458 = vmatpush1.bf16.msra.mxu0 %v376
        %459 = vmatprep.subr.bf16.mxu0 0
        %460 = vmatpush1.bf16.msra.mxu0 %v379
        %461 = vmatprep.subr.bf16.mxu0 0
        %462 = vmatpush1.bf16.msra.mxu0 0
        %463 = vmatprep.subr.bf16.mxu0 0
        %464 = vmatpush1.bf16.msra.mxu0 0
        %465 = vmatprep.subr.bf16.mxu0 0
        %466 = vmatpush1.bf16.msra.mxu0 0
        %467 = vmatprep.subr.bf16.mxu0 0
        %468 = vmatpush1.bf16.msra.mxu0 0
        %469 = vmatprep.subr.bf16.mxu0 0
        %470 = vmatpush1.bf16.msra.mxu0 0
        %471 = vmatprep.subr.bf16.mxu0 0
        %472 = vmatpush1.bf16.msra.mxu0 0
        %473 = vmatprep.subr.bf16.mxu0 0
        %474 = vmatpush1.bf16.msra.mxu0 0
        %475 = vmatprep.subr.bf16.mxu0 0
        %476 = vmatpush1.bf16.msra.mxu0 0
        %477 = vmatprep.mubr.bf16.mxu0 0
        %478 = vmatmul.mubr.bf16.gmra.mrb[0].mxu0 %v243
        %v479 = vpop.f32.mrb[0].mxu0
        %v480 = vadd.f32 0.0, %v479
        %v481 = vpop.f32.mrb[0].mxu0
        %v482 = vpop.f32.mrb[0].mxu0
        %v483 = vpop.f32.mrb[0].mxu0
        %484 = vdwg.mxu0
        %v485 = vpack.c.bf16 %v439, %v439
        %v486 = vpack.c.bf16 %v441, %v441
        %v487 = vpack.c.bf16 %v480, %v480
        %v491 = vunpack.c.l.b16 %v485
        %v492 = vunpack.c.l.b16 %v486
        %v493 = vunpack.c.l.b16 %v487
        %v494 = vpack.c.b16 %v492, %v491
        %v495 = vpack.c.b16 %v493, %v493
        %498 = vst [vmem:[#allocation2] sm:$0xff] %v494
        %499 = vst [vmem:[#allocation2 + $0x8] sm:$0xf] %v495
        %s500 = smul.u32 0, 3
        %s501 = smul.addr %s500, 4
        %s502 = scalar_lea.vmem [#allocation2], %s501
        %v503 = vld [vmem:[%s502] sm:$0xf]
        %v504 = vld [vmem:[%s502 + $0x4] sm:$0xf]
        %v505 = vld [vmem:[%s502 + $0x8] sm:$0xf]
        %vm506 = vcmask 130048
        %v508 = vsel %vm506, %v503, 0
        %v511 = vsel %vm506, %v504, 0
        %513 = vmatprep.subr.bf16.mxu0 0
        %514 = vmatpush1.bf16.xpose.msra.mxu0 %v511
        %515 = vmatprep.subr.bf16.mxu0 0
        %516 = vmatpush1.bf16.xpose.msra.mxu0 0
        %517 = vmatprep.subr.bf16.mxu0 0
        %518 = vmatpush1.bf16.xpose.msra.mxu0 0
        %519 = vmatprep.subr.bf16.mxu0 0
        %520 = vmatpush1.bf16.xpose.msra.mxu0 0
        %521 = vmatprep.subr.bf16.mxu0 0
        %522 = vmatpush1.bf16.xpose.msra.mxu0 0
        %523 = vmatprep.subr.bf16.mxu0 0
        %524 = vmatpush1.bf16.xpose.msra.mxu0 0
        %525 = vmatprep.subr.bf16.mxu0 0
        %526 = vmatpush1.bf16.xpose.msra.mxu0 0
        %527 = vmatprep.subr.bf16.mxu0 0
        %528 = vmatpush1.bf16.xpose.msra.mxu0 0
        %529 = vmatprep.subr.bf16.mxu0 0
        %530 = vmatpush1.bf16.xpose.msra.mxu0 0
        %531 = vmatprep.subr.bf16.mxu0 0
        %532 = vmatpush1.bf16.xpose.msra.mxu0 0
        %533 = vmatprep.subr.bf16.mxu0 0
        %534 = vmatpush1.bf16.xpose.msra.mxu0 0
        %535 = vmatprep.subr.bf16.mxu0 0
        %536 = vmatpush1.bf16.xpose.msra.mxu0 0
        %537 = vmatprep.subr.bf16.mxu0 0
        %538 = vmatpush1.bf16.xpose.msra.mxu0 0
        %539 = vmatprep.subr.bf16.mxu0 0
        %540 = vmatpush1.bf16.xpose.msra.mxu0 0
        %541 = vmatprep.subr.bf16.mxu0 0
        %542 = vmatpush1.bf16.xpose.msra.mxu0 0
        %543 = vmatprep.subr.bf16.mxu0 0
        %544 = vmatpush1.bf16.xpose.msra.mxu0 0
        %545 = vmatprep.mubr.bf16.mxu0 0
        %546 = vmatmul.mubr.bf16.gmra.mrb[0].mxu0 %v508
        %v547 = vpop.f32.mrb[0].mxu0
        %v548 = vadd.f32 0.0, %v547
        %v549 = vpop.f32.mrb[0].mxu0
        %v550 = vpop.f32.mrb[0].mxu0
        %v551 = vpop.f32.mrb[0].mxu0
        %552 = vdwg.mxu0
        %vm553 = vcmask 64512
        %v554 = vsel %vm553, %v548, -inf
        %555 = vmax.xlane.f32.xlu0 %v554
        %v556 = vpop.xlane.xlu0 %555
        %v557 = vsub.f32 %v548, %v556
        %v558 = vmul.f32 %v557, 1.442695
        %v559 = vpow.pop %v558
        %v560 = vsel %vm553, %v559, 0.0
        %561 = vadd.xlane.f32.xlu0 %v560
        %v562 = vpop.xlane.xlu0 %561
        %v563 = vpack.c.bf16 %v559, %v559
        %v565 = vsel %vm553, %v563, 0
        %vm567 = vcmask 1043456
        %v569 = vsel %vm567, %v505, 0
        %571 = vmatprep.subr.bf16.mxu0 0
        %572 = vmatpush1.bf16.msra.mxu0 %v569
        %573 = vmatprep.subr.bf16.mxu0 0
        %574 = vmatpush1.bf16.msra.mxu0 0
        %575 = vmatprep.subr.bf16.mxu0 0
        %576 = vmatpush1.bf16.msra.mxu0 0
        %577 = vmatprep.subr.bf16.mxu0 0
        %578 = vmatpush1.bf16.msra.mxu0 0
        %579 = vmatprep.subr.bf16.mxu0 0
        %580 = vmatpush1.bf16.msra.mxu0 0
        %581 = vmatprep.subr.bf16.mxu0 0
        %582 = vmatpush1.bf16.msra.mxu0 0
        %583 = vmatprep.subr.bf16.mxu0 0
        %584 = vmatpush1.bf16.msra.mxu0 0
        %585 = vmatprep.subr.bf16.mxu0 0
        %586 = vmatpush1.bf16.msra.mxu0 0
        %587 = vmatprep.subr.bf16.mxu0 0
        %588 = vmatpush1.bf16.msra.mxu0 0
        %589 = vmatprep.subr.bf16.mxu0 0
        %590 = vmatpush1.bf16.msra.mxu0 0
        %591 = vmatprep.subr.bf16.mxu0 0
        %592 = vmatpush1.bf16.msra.mxu0 0
        %593 = vmatprep.subr.bf16.mxu0 0
        %594 = vmatpush1.bf16.msra.mxu0 0
        %595 = vmatprep.subr.bf16.mxu0 0
        %596 = vmatpush1.bf16.msra.mxu0 0
        %597 = vmatprep.subr.bf16.mxu0 0
        %598 = vmatpush1.bf16.msra.mxu0 0
        %599 = vmatprep.subr.bf16.mxu0 0
        %600 = vmatpush1.bf16.msra.mxu0 0
        %601 = vmatprep.subr.bf16.mxu0 0
        %602 = vmatpush1.bf16.msra.mxu0 0
        %603 = vmatprep.mubr.bf16.mxu0 0
        %604 = vmatmul.mubr.bf16.gmra.mrb[0].mxu0 %v565
        %v605 = vpop.f32.mrb[0].mxu0
        %v606 = vadd.f32 0.0, %v605
        %v607 = vpop.f32.mrb[0].mxu0
        %v608 = vpop.f32.mrb[0].mxu0
        %v609 = vpop.f32.mrb[0].mxu0
        %610 = vdwg.mxu0
        %v611 = vrcp.pop %v562
        %v612 = vmul.f32 %v606, %v611
        %v614 = vunpack.c.l.b16 %v503
        %v615 = vpack.c.b16 %v614, %v614
        %616 = vrot.lane.b32.xlu0 %v615, 112
        %v617 = vpop.permute.xlu0 %616
        %v619 = vunpack.c.l.b16 %v504
        %v620 = vpack.c.b16 %v619, %v619
        %621 = vrot.lane.b32.xlu0 %v620, 112
        %v622 = vpop.permute.xlu0 %621
        %v624 = vsel %vm506, %v617, 0
        %v627 = vsel %vm506, %v622, 0
        %629 = vmatprep.subr.bf16.mxu0 0
        %630 = vmatpush1.bf16.xpose.msra.mxu0 %v627
        %631 = vmatprep.subr.bf16.mxu0 0
        %632 = vmatpush1.bf16.xpose.msra.mxu0 0
        %633 = vmatprep.subr.bf16.mxu0 0
        %634 = vmatpush1.bf16.xpose.msra.mxu0 0
        %635 = vmatprep.subr.bf16.mxu0 0
        %636 = vmatpush1.bf16.xpose.msra.mxu0 0
        %637 = vmatprep.subr.bf16.mxu0 0
        %638 = vmatpush1.bf16.xpose.msra.mxu0 0
        %639 = vmatprep.subr.bf16.mxu0 0
        %640 = vmatpush1.bf16.xpose.msra.mxu0 0
        %641 = vmatprep.subr.bf16.mxu0 0
        %642 = vmatpush1.bf16.xpose.msra.mxu0 0
        %643 = vmatprep.subr.bf16.mxu0 0
        %644 = vmatpush1.bf16.xpose.msra.mxu0 0
        %645 = vmatprep.subr.bf16.mxu0 0
        %646 = vmatpush1.bf16.xpose.msra.mxu0 0
        %647 = vmatprep.subr.bf16.mxu0 0
        %648 = vmatpush1.bf16.xpose.msra.mxu0 0
        %649 = vmatprep.subr.bf16.mxu0 0
        %650 = vmatpush1.bf16.xpose.msra.mxu0 0
        %651 = vmatprep.subr.bf16.mxu0 0
        %652 = vmatpush1.bf16.xpose.msra.mxu0 0
        %653 = vmatprep.subr.bf16.mxu0 0
        %654 = vmatpush1.bf16.xpose.msra.mxu0 0
        %655 = vmatprep.subr.bf16.mxu0 0
        %656 = vmatpush1.bf16.xpose.msra.mxu0 0
        %657 = vmatprep.subr.bf16.mxu0 0
        %658 = vmatpush1.bf16.xpose.msra.mxu0 0
        %659 = vmatprep.subr.bf16.mxu0 0
        %660 = vmatpush1.bf16.xpose.msra.mxu0 0
        %661 = vmatprep.mubr.bf16.mxu0 0
        %662 = vmatmul.mubr.bf16.gmra.mrb[0].mxu0 %v624
        %v663 = vpop.f32.mrb[0].mxu0
        %v664 = vadd.f32 0.0, %v663
        %v665 = vpop.f32.mrb[0].mxu0
        %v666 = vpop.f32.mrb[0].mxu0
        %v667 = vpop.f32.mrb[0].mxu0
        %668 = vdwg.mxu0
        %v669 = vsel %vm553, %v664, -inf
        %670 = vmax.xlane.f32.xlu0 %v669
        %v671 = vpop.xlane.xlu0 %670
        %v672 = vsub.f32 %v664, %v671
        %v673 = vmul.f32 %v672, 1.442695
        %v674 = vpow.pop %v673
        %v675 = vsel %vm553, %v674, 0.0
        %676 = vadd.xlane.f32.xlu0 %v675
        %v677 = vpop.xlane.xlu0 %676
        %v678 = vpack.c.bf16 %v674, %v674
        %v680 = vunpack.c.l.b16 %v505
        %v681 = vpack.c.b16 %v680, %v680
        %682 = vrot.lane.b32.xlu0 %v681, 112
        %v683 = vpop.permute.xlu0 %682
        %v685 = vsel %vm553, %v678, 0
        %v688 = vsel %vm567, %v683, 0
        %690 = vmatprep.subr.bf16.mxu0 0
        %691 = vmatpush1.bf16.msra.mxu0 %v688
        %692 = vmatprep.subr.bf16.mxu0 0
        %693 = vmatpush1.bf16.msra.mxu0 0
        %694 = vmatprep.subr.bf16.mxu0 0
        %695 = vmatpush1.bf16.msra.mxu0 0
        %696 = vmatprep.subr.bf16.mxu0 0
        %697 = vmatpush1.bf16.msra.mxu0 0
        %698 = vmatprep.subr.bf16.mxu0 0
        %699 = vmatpush1.bf16.msra.mxu0 0
        %700 = vmatprep.subr.bf16.mxu0 0
        %701 = vmatpush1.bf16.msra.mxu0 0
        %702 = vmatprep.subr.bf16.mxu0 0
        %703 = vmatpush1.bf16.msra.mxu0 0
        %704 = vmatprep.subr.bf16.mxu0 0
        %705 = vmatpush1.bf16.msra.mxu0 0
        %706 = vmatprep.subr.bf16.mxu0 0
        %707 = vmatpush1.bf16.msra.mxu0 0
        %708 = vmatprep.subr.bf16.mxu0 0
        %709 = vmatpush1.bf16.msra.mxu0 0
        %710 = vmatprep.subr.bf16.mxu0 0
        %711 = vmatpush1.bf16.msra.mxu0 0
        %712 = vmatprep.subr.bf16.mxu0 0
        %713 = vmatpush1.bf16.msra.mxu0 0
        %714 = vmatprep.subr.bf16.mxu0 0
        %715 = vmatpush1.bf16.msra.mxu0 0
        %716 = vmatprep.subr.bf16.mxu0 0
        %717 = vmatpush1.bf16.msra.mxu0 0
        %718 = vmatprep.subr.bf16.mxu0 0
        %719 = vmatpush1.bf16.msra.mxu0 0
        %720 = vmatprep.subr.bf16.mxu0 0
        %721 = vmatpush1.bf16.msra.mxu0 0
        %722 = vmatprep.mubr.bf16.mxu0 0
        %723 = vmatmul.mubr.bf16.gmra.mrb[0].mxu0 %v685
        %v724 = vpop.f32.mrb[0].mxu0
        %v725 = vadd.f32 0.0, %v724
        %v726 = vpop.f32.mrb[0].mxu0
        %v727 = vpop.f32.mrb[0].mxu0
        %v728 = vpop.f32.mrb[0].mxu0
        %729 = vdwg.mxu0
        %v730 = vrcp.pop %v677
        %v731 = vmul.f32 %v725, %v730
        %732 = vrot.lane.b32.xlu0 %v615, 96
        %v733 = vpop.permute.xlu0 %732
        %734 = vrot.lane.b32.xlu0 %v620, 96
        %v735 = vpop.permute.xlu0 %734
        %v737 = vsel %vm506, %v733, 0
        %v740 = vsel %vm506, %v735, 0
        %742 = vmatprep.subr.bf16.mxu0 0
        %743 = vmatpush1.bf16.xpose.msra.mxu0 %v740
        %744 = vmatprep.subr.bf16.mxu0 0
        %745 = vmatpush1.bf16.xpose.msra.mxu0 0
        %746 = vmatprep.subr.bf16.mxu0 0
        %747 = vmatpush1.bf16.xpose.msra.mxu0 0
        %748 = vmatprep.subr.bf16.mxu0 0
        %749 = vmatpush1.bf16.xpose.msra.mxu0 0
        %750 = vmatprep.subr.bf16.mxu0 0
        %751 = vmatpush1.bf16.xpose.msra.mxu0 0
        %752 = vmatprep.subr.bf16.mxu0 0
        %753 = vmatpush1.bf16.xpose.msra.mxu0 0
        %754 = vmatprep.subr.bf16.mxu0 0
        %755 = vmatpush1.bf16.xpose.msra.mxu0 0
        %756 = vmatprep.subr.bf16.mxu0 0
        %757 = vmatpush1.bf16.xpose.msra.mxu0 0
        %758 = vmatprep.subr.bf16.mxu0 0
        %759 = vmatpush1.bf16.xpose.msra.mxu0 0
        %760 = vmatprep.subr.bf16.mxu0 0
        %761 = vmatpush1.bf16.xpose.msra.mxu0 0
        %762 = vmatprep.subr.bf16.mxu0 0
        %763 = vmatpush1.bf16.xpose.msra.mxu0 0
        %764 = vmatprep.subr.bf16.mxu0 0
        %765 = vmatpush1.bf16.xpose.msra.mxu0 0
        %766 = vmatprep.subr.bf16.mxu0 0
        %767 = vmatpush1.bf16.xpose.msra.mxu0 0
        %768 = vmatprep.subr.bf16.mxu0 0
        %769 = vmatpush1.bf16.xpose.msra.mxu0 0
        %770 = vmatprep.subr.bf16.mxu0 0
        %771 = vmatpush1.bf16.xpose.msra.mxu0 0
        %772 = vmatprep.subr.bf16.mxu0 0
        %773 = vmatpush1.bf16.xpose.msra.mxu0 0
        %774 = vmatprep.mubr.bf16.mxu0 0
        %775 = vmatmul.mubr.bf16.gmra.mrb[0].mxu0 %v737
        %v776 = vpop.f32.mrb[0].mxu0
        %v777 = vadd.f32 0.0, %v776
        %v778 = vpop.f32.mrb[0].mxu0
        %v779 = vpop.f32.mrb[0].mxu0
        %v780 = vpop.f32.mrb[0].mxu0
        %781 = vdwg.mxu0
        %v782 = vsel %vm553, %v777, -inf
        %783 = vmax.xlane.f32.xlu0 %v782
        %v784 = vpop.xlane.xlu0 %783
        %v785 = vsub.f32 %v777, %v784
        %v786 = vmul.f32 %v785, 1.442695
        %v787 = vpow.pop %v786
        %v788 = vsel %vm553, %v787, 0.0
        %789 = vadd.xlane.f32.xlu0 %v788
        %v790 = vpop.xlane.xlu0 %789
        %v791 = vpack.c.bf16 %v787, %v787
        %792 = vrot.lane.b32.xlu0 %v681, 96
        %v793 = vpop.permute.xlu0 %792
        %v795 = vsel %vm553, %v791, 0
        %v798 = vsel %vm567, %v793, 0
        %800 = vmatprep.subr.bf16.mxu0 0
        %801 = vmatpush1.bf16.msra.mxu0 %v798
        %802 = vmatprep.subr.bf16.mxu0 0
        %803 = vmatpush1.bf16.msra.mxu0 0
        %804 = vmatprep.subr.bf16.mxu0 0
        %805 = vmatpush1.bf16.msra.mxu0 0
        %806 = vmatprep.subr.bf16.mxu0 0
        %807 = vmatpush1.bf16.msra.mxu0 0
        %808 = vmatprep.subr.bf16.mxu0 0
        %809 = vmatpush1.bf16.msra.mxu0 0
        %810 = vmatprep.subr.bf16.mxu0 0
        %811 = vmatpush1.bf16.msra.mxu0 0
        %812 = vmatprep.subr.bf16.mxu0 0
        %813 = vmatpush1.bf16.msra.mxu0 0
        %814 = vmatprep.subr.bf16.mxu0 0
        %815 = vmatpush1.bf16.msra.mxu0 0
        %816 = vmatprep.subr.bf16.mxu0 0
        %817 = vmatpush1.bf16.msra.mxu0 0
        %818 = vmatprep.subr.bf16.mxu0 0
        %819 = vmatpush1.bf16.msra.mxu0 0
        %820 = vmatprep.subr.bf16.mxu0 0
        %821 = vmatpush1.bf16.msra.mxu0 0
        %822 = vmatprep.subr.bf16.mxu0 0
        %823 = vmatpush1.bf16.msra.mxu0 0
        %824 = vmatprep.subr.bf16.mxu0 0
        %825 = vmatpush1.bf16.msra.mxu0 0
        %826 = vmatprep.subr.bf16.mxu0 0
        %827 = vmatpush1.bf16.msra.mxu0 0
        %828 = vmatprep.subr.bf16.mxu0 0
        %829 = vmatpush1.bf16.msra.mxu0 0
        %830 = vmatprep.subr.bf16.mxu0 0
        %831 = vmatpush1.bf16.msra.mxu0 0
        %832 = vmatprep.mubr.bf16.mxu0 0
        %833 = vmatmul.mubr.bf16.gmra.mrb[0].mxu0 %v795
        %v834 = vpop.f32.mrb[0].mxu0
        %v835 = vadd.f32 0.0, %v834
        %v836 = vpop.f32.mrb[0].mxu0
        %v837 = vpop.f32.mrb[0].mxu0
        %v838 = vpop.f32.mrb[0].mxu0
        %839 = vdwg.mxu0
        %v840 = vrcp.pop %v790
        %v841 = vmul.f32 %v835, %v840
        %842 = vrot.lane.b32.xlu0 %v615, 80
        %v843 = vpop.permute.xlu0 %842
        %844 = vrot.lane.b32.xlu0 %v620, 80
        %v845 = vpop.permute.xlu0 %844
        %v847 = vsel %vm506, %v843, 0
        %v850 = vsel %vm506, %v845, 0
        %852 = vmatprep.subr.bf16.mxu0 0
        %853 = vmatpush1.bf16.xpose.msra.mxu0 %v850
        %854 = vmatprep.subr.bf16.mxu0 0
        %855 = vmatpush1.bf16.xpose.msra.mxu0 0
        %856 = vmatprep.subr.bf16.mxu0 0
        %857 = vmatpush1.bf16.xpose.msra.mxu0 0
        %858 = vmatprep.subr.bf16.mxu0 0
        %859 = vmatpush1.bf16.xpose.msra.mxu0 0
        %860 = vmatprep.subr.bf16.mxu0 0
        %861 = vmatpush1.bf16.xpose.msra.mxu0 0
        %862 = vmatprep.subr.bf16.mxu0 0
        %863 = vmatpush1.bf16.xpose.msra.mxu0 0
        %864 = vmatprep.subr.bf16.mxu0 0
        %865 = vmatpush1.bf16.xpose.msra.mxu0 0
        %866 = vmatprep.subr.bf16.mxu0 0
        %867 = vmatpush1.bf16.xpose.msra.mxu0 0
        %868 = vmatprep.subr.bf16.mxu0 0
        %869 = vmatpush1.bf16.xpose.msra.mxu0 0
        %870 = vmatprep.subr.bf16.mxu0 0
        %871 = vmatpush1.bf16.xpose.msra.mxu0 0
        %872 = vmatprep.subr.bf16.mxu0 0
        %873 = vmatpush1.bf16.xpose.msra.mxu0 0
        %874 = vmatprep.subr.bf16.mxu0 0
        %875 = vmatpush1.bf16.xpose.msra.mxu0 0
        %876 = vmatprep.subr.bf16.mxu0 0
        %877 = vmatpush1.bf16.xpose.msra.mxu0 0
        %878 = vmatprep.subr.bf16.mxu0 0
        %879 = vmatpush1.bf16.xpose.msra.mxu0 0
        %880 = vmatprep.subr.bf16.mxu0 0
        %881 = vmatpush1.bf16.xpose.msra.mxu0 0
        %882 = vmatprep.subr.bf16.mxu0 0
        %883 = vmatpush1.bf16.xpose.msra.mxu0 0
        %884 = vmatprep.mubr.bf16.mxu0 0
        %885 = vmatmul.mubr.bf16.gmra.mrb[0].mxu0 %v847
        %v886 = vpop.f32.mrb[0].mxu0
        %v887 = vadd.f32 0.0, %v886
        %v888 = vpop.f32.mrb[0].mxu0
        %v889 = vpop.f32.mrb[0].mxu0
        %v890 = vpop.f32.mrb[0].mxu0
        %891 = vdwg.mxu0
        %v892 = vsel %vm553, %v887, -inf
        %893 = vmax.xlane.f32.xlu0 %v892
        %v894 = vpop.xlane.xlu0 %893
        %v895 = vsub.f32 %v887, %v894
        %v896 = vmul.f32 %v895, 1.442695
        %v897 = vpow.pop %v896
        %v898 = vsel %vm553, %v897, 0.0
        %899 = vadd.xlane.f32.xlu0 %v898
        %v900 = vpop.xlane.xlu0 %899
        %v901 = vpack.c.bf16 %v897, %v897
        %902 = vrot.lane.b32.xlu0 %v681, 80
        %v903 = vpop.permute.xlu0 %902
        %v905 = vsel %vm553, %v901, 0
        %v908 = vsel %vm567, %v903, 0
        %910 = vmatprep.subr.bf16.mxu0 0
        %911 = vmatpush1.bf16.msra.mxu0 %v908
        %912 = vmatprep.subr.bf16.mxu0 0
        %913 = vmatpush1.bf16.msra.mxu0 0
        %914 = vmatprep.subr.bf16.mxu0 0
        %915 = vmatpush1.bf16.msra.mxu0 0
        %916 = vmatprep.subr.bf16.mxu0 0
        %917 = vmatpush1.bf16.msra.mxu0 0
        %918 = vmatprep.subr.bf16.mxu0 0
        %919 = vmatpush1.bf16.msra.mxu0 0
        %920 = vmatprep.subr.bf16.mxu0 0
        %921 = vmatpush1.bf16.msra.mxu0 0
        %922 = vmatprep.subr.bf16.mxu0 0
        %923 = vmatpush1.bf16.msra.mxu0 0
        %924 = vmatprep.subr.bf16.mxu0 0
        %925 = vmatpush1.bf16.msra.mxu0 0
        %926 = vmatprep.subr.bf16.mxu0 0
        %927 = vmatpush1.bf16.msra.mxu0 0
        %928 = vmatprep.subr.bf16.mxu0 0
        %929 = vmatpush1.bf16.msra.mxu0 0
        %930 = vmatprep.subr.bf16.mxu0 0
        %931 = vmatpush1.bf16.msra.mxu0 0
        %932 = vmatprep.subr.bf16.mxu0 0
        %933 = vmatpush1.bf16.msra.mxu0 0
        %934 = vmatprep.subr.bf16.mxu0 0
        %935 = vmatpush1.bf16.msra.mxu0 0
        %936 = vmatprep.subr.bf16.mxu0 0
        %937 = vmatpush1.bf16.msra.mxu0 0
        %938 = vmatprep.subr.bf16.mxu0 0
        %939 = vmatpush1.bf16.msra.mxu0 0
        %940 = vmatprep.subr.bf16.mxu0 0
        %941 = vmatpush1.bf16.msra.mxu0 0
        %942 = vmatprep.mubr.bf16.mxu0 0
        %943 = vmatmul.mubr.bf16.gmra.mrb[0].mxu0 %v905
        %v944 = vpop.f32.mrb[0].mxu0
        %v945 = vadd.f32 0.0, %v944
        %v946 = vpop.f32.mrb[0].mxu0
        %v947 = vpop.f32.mrb[0].mxu0
        %v948 = vpop.f32.mrb[0].mxu0
        %949 = vdwg.mxu0
        %v950 = vrcp.pop %v900
        %v951 = vmul.f32 %v945, %v950
        %952 = vrot.lane.b32.xlu0 %v615, 64
        %v953 = vpop.permute.xlu0 %952
        %954 = vrot.lane.b32.xlu0 %v620, 64
        %v955 = vpop.permute.xlu0 %954
        %v957 = vsel %vm506, %v953, 0
        %v960 = vsel %vm506, %v955, 0
        %962 = vmatprep.subr.bf16.mxu0 0
        %963 = vmatpush1.bf16.xpose.msra.mxu0 %v960
        %964 = vmatprep.subr.bf16.mxu0 0
        %965 = vmatpush1.bf16.xpose.msra.mxu0 0
        %966 = vmatprep.subr.bf16.mxu0 0
        %967 = vmatpush1.bf16.xpose.msra.mxu0 0
        %968 = vmatprep.subr.bf16.mxu0 0
        %969 = vmatpush1.bf16.xpose.msra.mxu0 0
        %970 = vmatprep.subr.bf16.mxu0 0
        %971 = vmatpush1.bf16.xpose.msra.mxu0 0
        %972 = vmatprep.subr.bf16.mxu0 0
        %973 = vmatpush1.bf16.xpose.msra.mxu0 0
        %974 = vmatprep.subr.bf16.mxu0 0
        %975 = vmatpush1.bf16.xpose.msra.mxu0 0
        %976 = vmatprep.subr.bf16.mxu0 0
        %977 = vmatpush1.bf16.xpose.msra.mxu0 0
        %978 = vmatprep.subr.bf16.mxu0 0
        %979 = vmatpush1.bf16.xpose.msra.mxu0 0
        %980 = vmatprep.subr.bf16.mxu0 0
        %981 = vmatpush1.bf16.xpose.msra.mxu0 0
        %982 = vmatprep.subr.bf16.mxu0 0
        %983 = vmatpush1.bf16.xpose.msra.mxu0 0
        %984 = vmatprep.subr.bf16.mxu0 0
        %985 = vmatpush1.bf16.xpose.msra.mxu0 0
        %986 = vmatprep.subr.bf16.mxu0 0
        %987 = vmatpush1.bf16.xpose.msra.mxu0 0
        %988 = vmatprep.subr.bf16.mxu0 0
        %989 = vmatpush1.bf16.xpose.msra.mxu0 0
        %990 = vmatprep.subr.bf16.mxu0 0
        %991 = vmatpush1.bf16.xpose.msra.mxu0 0
        %992 = vmatprep.subr.bf16.mxu0 0
        %993 = vmatpush1.bf16.xpose.msra.mxu0 0
        %994 = vmatprep.mubr.bf16.mxu0 0
        %995 = vmatmul.mubr.bf16.gmra.mrb[0].mxu0 %v957
        %v996 = vpop.f32.mrb[0].mxu0
        %v997 = vadd.f32 0.0, %v996
        %v998 = vpop.f32.mrb[0].mxu0
        %v999 = vpop.f32.mrb[0].mxu0
        %v1000 = vpop.f32.mrb[0].mxu0
        %1001 = vdwg.mxu0
        %v1002 = vsel %vm553, %v997, -inf
        %1003 = vmax.xlane.f32.xlu0 %v1002
        %v1004 = vpop.xlane.xlu0 %1003
        %v1005 = vsub.f32 %v997, %v1004
        %v1006 = vmul.f32 %v1005, 1.442695
        %v1007 = vpow.pop %v1006
        %v1008 = vsel %vm553, %v1007, 0.0
        %1009 = vadd.xlane.f32.xlu0 %v1008
        %v1010 = vpop.xlane.xlu0 %1009
        %v1011 = vpack.c.bf16 %v1007, %v1007
        %1012 = vrot.lane.b32.xlu0 %v681, 64
        %v1013 = vpop.permute.xlu0 %1012
        %v1015 = vsel %vm553, %v1011, 0
        %v1018 = vsel %vm567, %v1013, 0
        %1020 = vmatprep.subr.bf16.mxu0 0
        %1021 = vmatpush1.bf16.msra.mxu0 %v1018
        %1022 = vmatprep.subr.bf16.mxu0 0
        %1023 = vmatpush1.bf16.msra.mxu0 0
        %1024 = vmatprep.subr.bf16.mxu0 0
        %1025 = vmatpush1.bf16.msra.mxu0 0
        %1026 = vmatprep.subr.bf16.mxu0 0
        %1027 = vmatpush1.bf16.msra.mxu0 0
        %1028 = vmatprep.subr.bf16.mxu0 0
        %1029 = vmatpush1.bf16.msra.mxu0 0
        %1030 = vmatprep.subr.bf16.mxu0 0
        %1031 = vmatpush1.bf16.msra.mxu0 0
        %1032 = vmatprep.subr.bf16.mxu0 0
        %1033 = vmatpush1.bf16.msra.mxu0 0
        %1034 = vmatprep.subr.bf16.mxu0 0
        %1035 = vmatpush1.bf16.msra.mxu0 0
        %1036 = vmatprep.subr.bf16.mxu0 0
        %1037 = vmatpush1.bf16.msra.mxu0 0
        %1038 = vmatprep.subr.bf16.mxu0 0
        %1039 = vmatpush1.bf16.msra.mxu0 0
        %1040 = vmatprep.subr.bf16.mxu0 0
        %1041 = vmatpush1.bf16.msra.mxu0 0
        %1042 = vmatprep.subr.bf16.mxu0 0
        %1043 = vmatpush1.bf16.msra.mxu0 0
        %1044 = vmatprep.subr.bf16.mxu0 0
        %1045 = vmatpush1.bf16.msra.mxu0 0
        %1046 = vmatprep.subr.bf16.mxu0 0
        %1047 = vmatpush1.bf16.msra.mxu0 0
        %1048 = vmatprep.subr.bf16.mxu0 0
        %1049 = vmatpush1.bf16.msra.mxu0 0
        %1050 = vmatprep.subr.bf16.mxu0 0
        %1051 = vmatpush1.bf16.msra.mxu0 0
        %1052 = vmatprep.mubr.bf16.mxu0 0
        %1053 = vmatmul.mubr.bf16.gmra.mrb[0].mxu0 %v1015
        %v1054 = vpop.f32.mrb[0].mxu0
        %v1055 = vadd.f32 0.0, %v1054
        %v1056 = vpop.f32.mrb[0].mxu0
        %v1057 = vpop.f32.mrb[0].mxu0
        %v1058 = vpop.f32.mrb[0].mxu0
        %1059 = vdwg.mxu0
        %v1060 = vrcp.pop %v1010
        %v1061 = vmul.f32 %v1055, %v1060
        %1062 = vrot.lane.b32.xlu0 %v615, 48
        %v1063 = vpop.permute.xlu0 %1062
        %1064 = vrot.lane.b32.xlu0 %v620, 48
        %v1065 = vpop.permute.xlu0 %1064
        %v1067 = vsel %vm506, %v1063, 0
        %v1070 = vsel %vm506, %v1065, 0
        %1072 = vmatprep.subr.bf16.mxu0 0
        %1073 = vmatpush1.bf16.xpose.msra.mxu0 %v1070
        %1074 = vmatprep.subr.bf16.mxu0 0
        %1075 = vmatpush1.bf16.xpose.msra.mxu0 0
        %1076 = vmatprep.subr.bf16.mxu0 0
        %1077 = vmatpush1.bf16.xpose.msra.mxu0 0
        %1078 = vmatprep.subr.bf16.mxu0 0
        %1079 = vmatpush1.bf16.xpose.msra.mxu0 0
        %1080 = vmatprep.subr.bf16.mxu0 0
        %1081 = vmatpush1.bf16.xpose.msra.mxu0 0
        %1082 = vmatprep.subr.bf16.mxu0 0
        %1083 = vmatpush1.bf16.xpose.msra.mxu0 0
        %1084 = vmatprep.subr.bf16.mxu0 0
        %1085 = vmatpush1.bf16.xpose.msra.mxu0 0
        %1086 = vmatprep.subr.bf16.mxu0 0
        %1087 = vmatpush1.bf16.xpose.msra.mxu0 0
        %1088 = vmatprep.subr.bf16.mxu0 0
        %1089 = vmatpush1.bf16.xpose.msra.mxu0 0
        %1090 = vmatprep.subr.bf16.mxu0 0
        %1091 = vmatpush1.bf16.xpose.msra.mxu0 0
        %1092 = vmatprep.subr.bf16.mxu0 0
        %1093 = vmatpush1.bf16.xpose.msra.mxu0 0
        %1094 = vmatprep.subr.bf16.mxu0 0
        %1095 = vmatpush1.bf16.xpose.msra.mxu0 0
        %1096 = vmatprep.subr.bf16.mxu0 0
        %1097 = vmatpush1.bf16.xpose.msra.mxu0 0
        %1098 = vmatprep.subr.bf16.mxu0 0
        %1099 = vmatpush1.bf16.xpose.msra.mxu0 0
        %1100 = vmatprep.subr.bf16.mxu0 0
        %1101 = vmatpush1.bf16.xpose.msra.mxu0 0
        %1102 = vmatprep.subr.bf16.mxu0 0
        %1103 = vmatpush1.bf16.xpose.msra.mxu0 0
        %1104 = vmatprep.mubr.bf16.mxu0 0
        %1105 = vmatmul.mubr.bf16.gmra.mrb[0].mxu0 %v1067
        %v1106 = vpop.f32.mrb[0].mxu0
        %v1107 = vadd.f32 0.0, %v1106
        %v1108 = vpop.f32.mrb[0].mxu0
        %v1109 = vpop.f32.mrb[0].mxu0
        %v1110 = vpop.f32.mrb[0].mxu0
        %1111 = vdwg.mxu0
        %v1112 = vsel %vm553, %v1107, -inf
        %1113 = vmax.xlane.f32.xlu0 %v1112
        %v1114 = vpop.xlane.xlu0 %1113
        %v1115 = vsub.f32 %v1107, %v1114
        %v1116 = vmul.f32 %v1115, 1.442695
        %v1117 = vpow.pop %v1116
        %v1118 = vsel %vm553, %v1117, 0.0
        %1119 = vadd.xlane.f32.xlu0 %v1118
        %v1120 = vpop.xlane.xlu0 %1119
        %v1121 = vpack.c.bf16 %v1117, %v1117
        %1122 = vrot.lane.b32.xlu0 %v681, 48
        %v1123 = vpop.permute.xlu0 %1122
        %v1125 = vsel %vm553, %v1121, 0
        %v1128 = vsel %vm567, %v1123, 0
        %1130 = vmatprep.subr.bf16.mxu0 0
        %1131 = vmatpush1.bf16.msra.mxu0 %v1128
        %1132 = vmatprep.subr.bf16.mxu0 0
        %1133 = vmatpush1.bf16.msra.mxu0 0
        %1134 = vmatprep.subr.bf16.mxu0 0
        %1135 = vmatpush1.bf16.msra.mxu0 0
        %1136 = vmatprep.subr.bf16.mxu0 0
        %1137 = vmatpush1.bf16.msra.mxu0 0
        %1138 = vmatprep.subr.bf16.mxu0 0
        %1139 = vmatpush1.bf16.msra.mxu0 0
        %1140 = vmatprep.subr.bf16.mxu0 0
        %1141 = vmatpush1.bf16.msra.mxu0 0
        %1142 = vmatprep.subr.bf16.mxu0 0
        %1143 = vmatpush1.bf16.msra.mxu0 0
        %1144 = vmatprep.subr.bf16.mxu0 0
        %1145 = vmatpush1.bf16.msra.mxu0 0
        %1146 = vmatprep.subr.bf16.mxu0 0
        %1147 = vmatpush1.bf16.msra.mxu0 0
        %1148 = vmatprep.subr.bf16.mxu0 0
        %1149 = vmatpush1.bf16.msra.mxu0 0
        %1150 = vmatprep.subr.bf16.mxu0 0
        %1151 = vmatpush1.bf16.msra.mxu0 0
        %1152 = vmatprep.subr.bf16.mxu0 0
        %1153 = vmatpush1.bf16.msra.mxu0 0
        %1154 = vmatprep.subr.bf16.mxu0 0
        %1155 = vmatpush1.bf16.msra.mxu0 0
        %1156 = vmatprep.subr.bf16.mxu0 0
        %1157 = vmatpush1.bf16.msra.mxu0 0
        %1158 = vmatprep.subr.bf16.mxu0 0
        %1159 = vmatpush1.bf16.msra.mxu0 0
        %1160 = vmatprep.subr.bf16.mxu0 0
        %1161 = vmatpush1.bf16.msra.mxu0 0
        %1162 = vmatprep.mubr.bf16.mxu0 0
        %1163 = vmatmul.mubr.bf16.gmra.mrb[0].mxu0 %v1125
        %v1164 = vpop.f32.mrb[0].mxu0
        %v1165 = vadd.f32 0.0, %v1164
        %v1166 = vpop.f32.mrb[0].mxu0
        %v1167 = vpop.f32.mrb[0].mxu0
        %v1168 = vpop.f32.mrb[0].mxu0
        %1169 = vdwg.mxu0
        %v1170 = vrcp.pop %v1120
        %v1171 = vmul.f32 %v1165, %v1170
        %1172 = vrot.lane.b32.xlu0 %v615, 32
        %v1173 = vpop.permute.xlu0 %1172
        %1174 = vrot.lane.b32.xlu0 %v620, 32
        %v1175 = vpop.permute.xlu0 %1174
        %v1177 = vsel %vm506, %v1173, 0
        %v1180 = vsel %vm506, %v1175, 0
        %1182 = vmatprep.subr.bf16.mxu0 0
        %1183 = vmatpush1.bf16.xpose.msra.mxu0 %v1180
        %1184 = vmatprep.subr.bf16.mxu0 0
        %1185 = vmatpush1.bf16.xpose.msra.mxu0 0
        %1186 = vmatprep.subr.bf16.mxu0 0
        %1187 = vmatpush1.bf16.xpose.msra.mxu0 0
        %1188 = vmatprep.subr.bf16.mxu0 0
        %1189 = vmatpush1.bf16.xpose.msra.mxu0 0
        %1190 = vmatprep.subr.bf16.mxu0 0
        %1191 = vmatpush1.bf16.xpose.msra.mxu0 0
        %1192 = vmatprep.subr.bf16.mxu0 0
        %1193 = vmatpush1.bf16.xpose.msra.mxu0 0
        %1194 = vmatprep.subr.bf16.mxu0 0
        %1195 = vmatpush1.bf16.xpose.msra.mxu0 0
        %1196 = vmatprep.subr.bf16.mxu0 0
        %1197 = vmatpush1.bf16.xpose.msra.mxu0 0
        %1198 = vmatprep.subr.bf16.mxu0 0
        %1199 = vmatpush1.bf16.xpose.msra.mxu0 0
        %1200 = vmatprep.subr.bf16.mxu0 0
        %1201 = vmatpush1.bf16.xpose.msra.mxu0 0
        %1202 = vmatprep.subr.bf16.mxu0 0
        %1203 = vmatpush1.bf16.xpose.msra.mxu0 0
        %1204 = vmatprep.subr.bf16.mxu0 0
        %1205 = vmatpush1.bf16.xpose.msra.mxu0 0
        %1206 = vmatprep.subr.bf16.mxu0 0
        %1207 = vmatpush1.bf16.xpose.msra.mxu0 0
        %1208 = vmatprep.subr.bf16.mxu0 0
        %1209 = vmatpush1.bf16.xpose.msra.mxu0 0
        %1210 = vmatprep.subr.bf16.mxu0 0
        %1211 = vmatpush1.bf16.xpose.msra.mxu0 0
        %1212 = vmatprep.subr.bf16.mxu0 0
        %1213 = vmatpush1.bf16.xpose.msra.mxu0 0
        %1214 = vmatprep.mubr.bf16.mxu0 0
        %1215 = vmatmul.mubr.bf16.gmra.mrb[0].mxu0 %v1177
        %v1216 = vpop.f32.mrb[0].mxu0
        %v1217 = vadd.f32 0.0, %v1216
        %v1218 = vpop.f32.mrb[0].mxu0
        %v1219 = vpop.f32.mrb[0].mxu0
        %v1220 = vpop.f32.mrb[0].mxu0
        %1221 = vdwg.mxu0
        %v1222 = vsel %vm553, %v1217, -inf
        %1223 = vmax.xlane.f32.xlu0 %v1222
        %v1224 = vpop.xlane.xlu0 %1223
        %v1225 = vsub.f32 %v1217, %v1224
        %v1226 = vmul.f32 %v1225, 1.442695
        %v1227 = vpow.pop %v1226
        %v1228 = vsel %vm553, %v1227, 0.0
        %1229 = vadd.xlane.f32.xlu0 %v1228
        %v1230 = vpop.xlane.xlu0 %1229
        %v1231 = vpack.c.bf16 %v1227, %v1227
        %1232 = vrot.lane.b32.xlu0 %v681, 32
        %v1233 = vpop.permute.xlu0 %1232
        %v1235 = vsel %vm553, %v1231, 0
        %v1238 = vsel %vm567, %v1233, 0
        %1240 = vmatprep.subr.bf16.mxu0 0
        %1241 = vmatpush1.bf16.msra.mxu0 %v1238
        %1242 = vmatprep.subr.bf16.mxu0 0
        %1243 = vmatpush1.bf16.msra.mxu0 0
        %1244 = vmatprep.subr.bf16.mxu0 0
        %1245 = vmatpush1.bf16.msra.mxu0 0
        %1246 = vmatprep.subr.bf16.mxu0 0
        %1247 = vmatpush1.bf16.msra.mxu0 0
        %1248 = vmatprep.subr.bf16.mxu0 0
        %1249 = vmatpush1.bf16.msra.mxu0 0
        %1250 = vmatprep.subr.bf16.mxu0 0
        %1251 = vmatpush1.bf16.msra.mxu0 0
        %1252 = vmatprep.subr.bf16.mxu0 0
        %1253 = vmatpush1.bf16.msra.mxu0 0
        %1254 = vmatprep.subr.bf16.mxu0 0
        %1255 = vmatpush1.bf16.msra.mxu0 0
        %1256 = vmatprep.subr.bf16.mxu0 0
        %1257 = vmatpush1.bf16.msra.mxu0 0
        %1258 = vmatprep.subr.bf16.mxu0 0
        %1259 = vmatpush1.bf16.msra.mxu0 0
        %1260 = vmatprep.subr.bf16.mxu0 0
        %1261 = vmatpush1.bf16.msra.mxu0 0
        %1262 = vmatprep.subr.bf16.mxu0 0
        %1263 = vmatpush1.bf16.msra.mxu0 0
        %1264 = vmatprep.subr.bf16.mxu0 0
        %1265 = vmatpush1.bf16.msra.mxu0 0
        %1266 = vmatprep.subr.bf16.mxu0 0
        %1267 = vmatpush1.bf16.msra.mxu0 0
        %1268 = vmatprep.subr.bf16.mxu0 0
        %1269 = vmatpush1.bf16.msra.mxu0 0
        %1270 = vmatprep.subr.bf16.mxu0 0
        %1271 = vmatpush1.bf16.msra.mxu0 0
        %1272 = vmatprep.mubr.bf16.mxu0 0
        %1273 = vmatmul.mubr.bf16.gmra.mrb[0].mxu0 %v1235
        %v1274 = vpop.f32.mrb[0].mxu0
        %v1275 = vadd.f32 0.0, %v1274
        %v1276 = vpop.f32.mrb[0].mxu0
        %v1277 = vpop.f32.mrb[0].mxu0
        %v1278 = vpop.f32.mrb[0].mxu0
        %1279 = vdwg.mxu0
        %v1280 = vrcp.pop %v1230
        %v1281 = vmul.f32 %v1275, %v1280
        %1282 = vrot.lane.b32.xlu0 %v615, 16
        %v1283 = vpop.permute.xlu0 %1282
        %1284 = vrot.lane.b32.xlu0 %v620, 16
        %v1285 = vpop.permute.xlu0 %1284
        %v1287 = vsel %vm506, %v1283, 0
        %v1290 = vsel %vm506, %v1285, 0
        %1292 = vmatprep.subr.bf16.mxu0 0
        %1293 = vmatpush1.bf16.xpose.msra.mxu0 %v1290
        %1294 = vmatprep.subr.bf16.mxu0 0
        %1295 = vmatpush1.bf16.xpose.msra.mxu0 0
        %1296 = vmatprep.subr.bf16.mxu0 0
        %1297 = vmatpush1.bf16.xpose.msra.mxu0 0
        %1298 = vmatprep.subr.bf16.mxu0 0
        %1299 = vmatpush1.bf16.xpose.msra.mxu0 0
        %1300 = vmatprep.subr.bf16.mxu0 0
        %1301 = vmatpush1.bf16.xpose.msra.mxu0 0
        %1302 = vmatprep.subr.bf16.mxu0 0
        %1303 = vmatpush1.bf16.xpose.msra.mxu0 0
        %1304 = vmatprep.subr.bf16.mxu0 0
        %1305 = vmatpush1.bf16.xpose.msra.mxu0 0
        %1306 = vmatprep.subr.bf16.mxu0 0
        %1307 = vmatpush1.bf16.xpose.msra.mxu0 0
        %1308 = vmatprep.subr.bf16.mxu0 0
        %1309 = vmatpush1.bf16.xpose.msra.mxu0 0
        %1310 = vmatprep.subr.bf16.mxu0 0
        %1311 = vmatpush1.bf16.xpose.msra.mxu0 0
        %1312 = vmatprep.subr.bf16.mxu0 0
        %1313 = vmatpush1.bf16.xpose.msra.mxu0 0
        %1314 = vmatprep.subr.bf16.mxu0 0
        %1315 = vmatpush1.bf16.xpose.msra.mxu0 0
        %1316 = vmatprep.subr.bf16.mxu0 0
        %1317 = vmatpush1.bf16.xpose.msra.mxu0 0
        %1318 = vmatprep.subr.bf16.mxu0 0
        %1319 = vmatpush1.bf16.xpose.msra.mxu0 0
        %1320 = vmatprep.subr.bf16.mxu0 0
        %1321 = vmatpush1.bf16.xpose.msra.mxu0 0
        %1322 = vmatprep.subr.bf16.mxu0 0
        %1323 = vmatpush1.bf16.xpose.msra.mxu0 0
        %1324 = vmatprep.mubr.bf16.mxu0 0
        %1325 = vmatmul.mubr.bf16.gmra.mrb[0].mxu0 %v1287
        %v1326 = vpop.f32.mrb[0].mxu0
        %v1327 = vadd.f32 0.0, %v1326
        %v1328 = vpop.f32.mrb[0].mxu0
        %v1329 = vpop.f32.mrb[0].mxu0
        %v1330 = vpop.f32.mrb[0].mxu0
        %1331 = vdwg.mxu0
        %v1332 = vsel %vm553, %v1327, -inf
        %1333 = vmax.xlane.f32.xlu0 %v1332
        %v1334 = vpop.xlane.xlu0 %1333
        %v1335 = vsub.f32 %v1327, %v1334
        %v1336 = vmul.f32 %v1335, 1.442695
        %v1337 = vpow.pop %v1336
        %v1338 = vsel %vm553, %v1337, 0.0
        %1339 = vadd.xlane.f32.xlu0 %v1338
        %v1340 = vpop.xlane.xlu0 %1339
        %v1341 = vpack.c.bf16 %v1337, %v1337
        %1342 = vrot.lane.b32.xlu0 %v681, 16
        %v1343 = vpop.permute.xlu0 %1342
        %v1345 = vsel %vm553, %v1341, 0
        %v1348 = vsel %vm567, %v1343, 0
        %1350 = vmatprep.subr.bf16.mxu0 0
        %1351 = vmatpush1.bf16.msra.mxu0 %v1348
        %1352 = vmatprep.subr.bf16.mxu0 0
        %1353 = vmatpush1.bf16.msra.mxu0 0
        %1354 = vmatprep.subr.bf16.mxu0 0
        %1355 = vmatpush1.bf16.msra.mxu0 0
        %1356 = vmatprep.subr.bf16.mxu0 0
        %1357 = vmatpush1.bf16.msra.mxu0 0
        %1358 = vmatprep.subr.bf16.mxu0 0
        %1359 = vmatpush1.bf16.msra.mxu0 0
        %1360 = vmatprep.subr.bf16.mxu0 0
        %1361 = vmatpush1.bf16.msra.mxu0 0
        %1362 = vmatprep.subr.bf16.mxu0 0
        %1363 = vmatpush1.bf16.msra.mxu0 0
        %1364 = vmatprep.subr.bf16.mxu0 0
        %1365 = vmatpush1.bf16.msra.mxu0 0
        %1366 = vmatprep.subr.bf16.mxu0 0
        %1367 = vmatpush1.bf16.msra.mxu0 0
        %1368 = vmatprep.subr.bf16.mxu0 0
        %1369 = vmatpush1.bf16.msra.mxu0 0
        %1370 = vmatprep.subr.bf16.mxu0 0
        %1371 = vmatpush1.bf16.msra.mxu0 0
        %1372 = vmatprep.subr.bf16.mxu0 0
        %1373 = vmatpush1.bf16.msra.mxu0 0
        %1374 = vmatprep.subr.bf16.mxu0 0
        %1375 = vmatpush1.bf16.msra.mxu0 0
        %1376 = vmatprep.subr.bf16.mxu0 0
        %1377 = vmatpush1.bf16.msra.mxu0 0
        %1378 = vmatprep.subr.bf16.mxu0 0
        %1379 = vmatpush1.bf16.msra.mxu0 0
        %1380 = vmatprep.subr.bf16.mxu0 0
        %1381 = vmatpush1.bf16.msra.mxu0 0
        %1382 = vmatprep.mubr.bf16.mxu0 0
        %1383 = vmatmul.mubr.bf16.gmra.mrb[0].mxu0 %v1345
        %v1384 = vpop.f32.mrb[0].mxu0
        %v1385 = vadd.f32 0.0, %v1384
        %v1386 = vpop.f32.mrb[0].mxu0
        %v1387 = vpop.f32.mrb[0].mxu0
        %v1388 = vpop.f32.mrb[0].mxu0
        %1389 = vdwg.mxu0
        %v1390 = vrcp.pop %v1340
        %v1391 = vmul.f32 %v1385, %v1390
        %1393 = vrot.lane.b32.xlu0 %v731, 16
        %v1394 = vpop.permute.xlu0 %1393
        %1397 = vrot.lane.b32.xlu0 %v841, 32
        %v1398 = vpop.permute.xlu0 %1397
        %1401 = vrot.lane.b32.xlu0 %v951, 48
        %v1402 = vpop.permute.xlu0 %1401
        %1405 = vrot.lane.b32.xlu0 %v1061, 64
        %v1406 = vpop.permute.xlu0 %1405
        %1409 = vrot.lane.b32.xlu0 %v1171, 80
        %v1410 = vpop.permute.xlu0 %1409
        %1413 = vrot.lane.b32.xlu0 %v1281, 96
        %v1414 = vpop.permute.xlu0 %1413
        %1417 = vrot.lane.b32.xlu0 %v1391, 112
        %v1418 = vpop.permute.xlu0 %1417
        %v1420 = vsel %vm506, %v612, %v1394
        %vm1421 = vcmask 261120
        %v1422 = vsel %vm1421, %v1420, %v1398
        %vm1423 = vcmask 392192
        %v1424 = vsel %vm1423, %v1422, %v1402
        %vm1425 = vcmask 523264
        %v1426 = vsel %vm1425, %v1424, %v1406
        %vm1427 = vcmask 654336
        %v1428 = vsel %vm1427, %v1426, %v1410
        %vm1429 = vcmask 785408
        %v1430 = vsel %vm1429, %v1428, %v1414
        %vm1431 = vcmask 916480
        %v1432 = vsel %vm1431, %v1430, %v1418
        %v1433 = vpack.c.bf16 %v1432, %v1432
        %1434 = vst [vmem:[#allocation3] sm:$0xf] %v1433
        %v1435 = vld [vmem:[#allocation3] sm:$0xf]
        %v1436 = vld [vmem:[#allocation9] sm:$0xf]
        %v1437 = vld [vmem:[#allocation9 + $0x4] sm:$0xf]
        %v1438 = vld [vmem:[#allocation9 + $0x8] sm:$0xf]
        %v1439 = vld [vmem:[#allocation9 + $0xc] sm:$0xf]
        %v1440 = vld [vmem:[#allocation9 + $0x10] sm:$0xf]
        %v1441 = vld [vmem:[#allocation9 + $0x14] sm:$0xf]
        %v1442 = vld [vmem:[#allocation9 + $0x18] sm:$0xf]
        %v1443 = vld [vmem:[#allocation9 + $0x1c] sm:$0xf]
        %v1444 = vld [vmem:[#allocation9 + $0x20] sm:$0xf]
        %v1445 = vld [vmem:[#allocation9 + $0x24] sm:$0xf]
        %v1446 = vld [vmem:[#allocation9 + $0x28] sm:$0xf]
        %v1447 = vld [vmem:[#allocation9 + $0x2c] sm:$0xf]
        %v1448 = vld [vmem:[#allocation9 + $0x30] sm:$0xf]
        %v1449 = vld [vmem:[#allocation9 + $0x34] sm:$0xf]
        %v1450 = vld [vmem:[#allocation9 + $0x38] sm:$0xf]
        %v1451 = vld [vmem:[#allocation9 + $0x3c] sm:$0xf]
        %v1452 = vld [vmem:[%s3] sm:$0x1]
        %v1454 = vlaneseq
        %v1455 = vshrl.u32 %v1454, 7
        %v1456 = vsub.s32 0, %v1455
        %v1457 = vrot.slane %v1452, %v1456
        %v1475 = vunpack.c.l.b16 %v1436
        %v1476 = vunpack.c.l.b16 %v1437
        %v1477 = vunpack.c.l.b16 %v1438
        %v1478 = vunpack.c.l.b16 %v1439
        %v1479 = vunpack.c.l.b16 %v1440
        %v1480 = vunpack.c.l.b16 %v1441
        %v1481 = vunpack.c.l.b16 %v1442
        %v1482 = vunpack.c.l.b16 %v1443
        %v1483 = vunpack.c.l.b16 %v1444
        %v1484 = vunpack.c.l.b16 %v1445
        %v1485 = vunpack.c.l.b16 %v1446
        %v1486 = vunpack.c.l.b16 %v1447
        %v1487 = vunpack.c.l.b16 %v1448
        %v1488 = vunpack.c.l.b16 %v1449
        %v1489 = vunpack.c.l.b16 %v1450
        %v1490 = vunpack.c.l.b16 %v1451
        %v1491 = vpack.c.b16 %v1476, %v1475
        %v1492 = vpack.c.b16 %v1478, %v1477
        %v1493 = vpack.c.b16 %v1480, %v1479
        %v1494 = vpack.c.b16 %v1482, %v1481
        %v1495 = vpack.c.b16 %v1484, %v1483
        %v1496 = vpack.c.b16 %v1486, %v1485
        %v1497 = vpack.c.b16 %v1488, %v1487
        %v1498 = vpack.c.b16 %v1490, %v1489
        %1507 = vmatprep.subr.bf16.mxu0 0
        %1508 = vmatpush1.bf16.msra.mxu0 %v1491
        %1509 = vmatprep.subr.bf16.mxu0 0
        %1510 = vmatpush1.bf16.msra.mxu0 %v1492
        %1511 = vmatprep.subr.bf16.mxu0 0
        %1512 = vmatpush1.bf16.msra.mxu0 %v1493
        %1513 = vmatprep.subr.bf16.mxu0 0
        %1514 = vmatpush1.bf16.msra.mxu0 %v1494
        %1515 = vmatprep.subr.bf16.mxu0 0
        %1516 = vmatpush1.bf16.msra.mxu0 %v1495
        %1517 = vmatprep.subr.bf16.mxu0 0
        %1518 = vmatpush1.bf16.msra.mxu0 %v1496
        %1519 = vmatprep.subr.bf16.mxu0 0
        %1520 = vmatpush1.bf16.msra.mxu0 %v1497
        %1521 = vmatprep.subr.bf16.mxu0 0
        %1522 = vmatpush1.bf16.msra.mxu0 %v1498
        %1523 = vmatprep.subr.bf16.mxu0 0
        %1524 = vmatpush1.bf16.msra.mxu0 0
        %1525 = vmatprep.subr.bf16.mxu0 0
        %1526 = vmatpush1.bf16.msra.mxu0 0
        %1527 = vmatprep.subr.bf16.mxu0 0
        %1528 = vmatpush1.bf16.msra.mxu0 0
        %1529 = vmatprep.subr.bf16.mxu0 0
        %1530 = vmatpush1.bf16.msra.mxu0 0
        %1531 = vmatprep.subr.bf16.mxu0 0
        %1532 = vmatpush1.bf16.msra.mxu0 0
        %1533 = vmatprep.subr.bf16.mxu0 0
        %1534 = vmatpush1.bf16.msra.mxu0 0
        %1535 = vmatprep.subr.bf16.mxu0 0
        %1536 = vmatpush1.bf16.msra.mxu0 0
        %1537 = vmatprep.subr.bf16.mxu0 0
        %1538 = vmatpush1.bf16.msra.mxu0 0
        %1539 = vmatprep.mubr.bf16.mxu0 0
        %1540 = vmatmul.mubr.bf16.gmra.mrb[0].mxu0 %v1435
        %v1541 = vpop.f32.mrb[0].mxu0
        %v1542 = vadd.f32 %v1457, %v1541
        %v1543 = vpop.f32.mrb[0].mxu0
        %v1544 = vpop.f32.mrb[0].mxu0
        %v1545 = vpop.f32.mrb[0].mxu0
        %1546 = vdwg.mxu0
        %1547 = vst [vmem:[%s241] sm:$0xff] %v1542
        %s1548 = sand.u32 %s119, 1
        %s1549 = scalar_lea.sflag [#allocation6], %s1548
        %s1550 = sand.u32 %s119, 1
        %s1551 = smul.addr %s1550, 8
        %s1552 = scalar_lea.vmem [#allocation10], %s1551
        // Predicated region
        $region49: #{tpu_custom_call.1} parent=35 // pred_check
          %p1553 = pneg %p129
        $region50: #{tpu_custom_call.1} parent=35 // pred_check_branch
          %1555 = sbr.rel (%p1553) target = $region52
        $region51: #{tpu_custom_call.1} parent=35 // pred_region
          %s1557 = ssub.s32 128, 128
          %1558 = vsyncadd %s1549, %s1557
          %s1559 = smul.addr %s22, 128
          %s1560 = scalar_lea.hbm %s4, %s1559
          %s1562 = sshll.u32 %s1552, 4
          %s1563 = int_to_ptr.vmem [resolvable:$true] %s1562
          %1565 = dma.vmem_to_hbm [thread:$0]  %s1563, 128, %s1560, %s1549
        $region52: #{tpu_custom_call.1} parent=35 // pred_fallthru
          _
      $region36: #{tpu_custom_call.1} parent=5 // pred_fallthru
        _
      %p1566 = scmp.le.s32.totalorder 2, %s17
      // Predicated region
      $region53: #{tpu_custom_call.1} parent=5 // pred_check
        %p1567 = pneg %p1566
      $region54: #{tpu_custom_call.1} parent=5 // pred_check_branch
        %1569 = sbr.rel (%p1567) target = $region56
      $region55: #{tpu_custom_call.1} parent=5 // pred_region
        %s1570 = ssub.s32 %s17, 2
        // Predicated region
        $region57: #{tpu_custom_call.1} parent=55 // pred_check
          %p1571 = pneg %p135
        $region58: #{tpu_custom_call.1} parent=55 // pred_check_branch
          %1573 = sbr.rel (%p1571) target = $region60
        $region59: #{tpu_custom_call.1} parent=55 // pred_region
          %s1574 = sand.u32 %s120, 1
          %s1575 = scalar_lea.sflag [#allocation6], %s1574
          %s1576 = sand.u32 %s120, 1
          %s1577 = smul.addr %s1576, 8
          %s1578 = scalar_lea.vmem [#allocation10], %s1577
          %1579 = dma.done %s1575, 128
        $region60: #{tpu_custom_call.1} parent=55 // pred_fallthru
          _
      $region56: #{tpu_custom_call.1} parent=5 // pred_fallthru
        _
    $region6: #{tpu_custom_call.1} parent=1 // loop_footer
      %s21 = sadd.s32 1, %s17
    $region7: #{tpu_custom_call.1} parent=1 // loop_footer_branch
      %16 = sbr.rel target = $region3
    $region8: #{tpu_custom_call.1} parent=1 // loop_exit
      _
    %1580 = vsyncpa [#allocation5], 1
    %s1581 = scalar_lea.sflag [#allocation5], 1
    %1582 = vsyncpa %s1581, 1
    %1583 = vsyncpa [#allocation8], 1
    %1584 = vsyncpa [#allocation6], 1
    %s1585 = scalar_lea.sflag [#allocation6], 1
    %1586 = vsyncpa %s1585, 1

</llo_original>
